<compile_context>
chip_gen: v5e
topology: v5e:2x2
jax: 0.10.0
libtpu: 0.0.40
codegen_flags: <defaults>
</compile_context>

<pallas_src>
import numpy as np

import jax
import jax.numpy as jnp
from jax import lax
from jax.experimental import pallas as pl
from jax.experimental.pallas import tpu as pltpu  # noqa: F401  (no TPU-specific params needed here)

EPS = 1e-5


def conv1x1s2_bn_kernel(x_ref, sel_ref, w_ref, gamma_ref, beta_ref, o_ref):
    # x_ref:     (N, Cin, H*W)     f32   NCHW activation with spatial flattened
    # sel_ref:   (H*W, Ho*Wo)      bf16  one-hot stride-2 spatial selector
    # w_ref:     (Cout, Cin)       bf16  1x1 conv weight
    # gamma_ref: (Cout, 1)         f32
    # beta_ref:  (Cout, 1)         f32
    # o_ref:     (N, Cout, Ho*Wo)  f32   NCHW output with spatial flattened
    n_batch = x_ref.shape[0]
    cout = o_ref.shape[1]
    hw_out = o_ref.shape[2]
    m_total = n_batch * hw_out              # BN reduction size (N * Ho * Wo)
    inv_m = 1.0 / float(m_total)

    sel = sel_ref[...]                      # load once (avoid re-load per batch)
    wt = w_ref[...]

    ys = []
    s = jnp.zeros((cout, 1), jnp.float32)   # per-channel sum
    ss = jnp.zeros((cout, 1), jnp.float32)  # per-channel sum of squares
    for n in range(n_batch):                # N is tiny; unrolled at trace time
        xn = x_ref[n].astype(jnp.bfloat16)                                  # (Cin, H*W)
        # stride-2 spatial subsample via one-hot matmul (exact copy of bf16 values)
        xs = jnp.dot(xn, sel, preferred_element_type=jnp.float32).astype(jnp.bfloat16)  # (Cin, Ho*Wo)
        # 1x1 conv == channel contraction on the MXU, f32 accumulation
        yn = jnp.dot(wt, xs, preferred_element_type=jnp.float32)            # (Cout, Ho*Wo)
        ys.append(yn)
        s = s + jnp.sum(yn, axis=1, keepdims=True)
        ss = ss + jnp.sum(yn * yn, axis=1, keepdims=True)

    # training-mode (batch) statistics, biased variance -- matches PyTorch BN normalization
    mean = s * inv_m
    var = ss * inv_m - mean * mean
    inv_std = lax.rsqrt(var + EPS)
    scale = gamma_ref[...] * inv_std                 # fold gamma into 1/std  -> (Cout, 1)
    shift = beta_ref[...] - mean * scale             # y*scale + shift == (y-mean)/std*gamma + beta

    for n in range(n_batch):
        o_ref[n] = (ys[n] * scale + shift).astype(o_ref.dtype)


def _make_stride2_selector(H, W, dtype):
    """One-hot (H*W, Ho*Wo) matrix selecting x[..., 2*ho, 2*wo] from flattened spatial."""
    Ho, Wo = (H + 1) // 2, (W + 1) // 2
    sel = np.zeros((H * W, Ho * Wo), dtype=np.float32)
    src = (2 * np.arange(Ho))[:, None] * W + 2 * np.arange(Wo)[None, :]      # (Ho, Wo)
    sel[src.reshape(-1), np.arange(Ho * Wo)] = 1.0
    return jnp.asarray(sel, dtype=dtype)


def conv_bn_forward(x, w, gamma, beta):
    """x: [N, Cin, H, W] (NCHW) f32, w: [Cout, Cin, 1, 1], gamma/beta: [Cout]. Returns NCHW f32."""
    N, Cin, H, W = x.shape
    Cout = w.shape[0]
    Ho, Wo = (H + 1) // 2, (W + 1) // 2

    xf = x.reshape(N, Cin, H * W)                          # free metadata reshape
    sel = _make_stride2_selector(H, W, jnp.bfloat16)       # tiny one-hot selector
    wt = w.reshape(Cout, Cin).astype(jnp.bfloat16)         # 1x1 conv weight as matrix
    g2 = gamma.reshape(Cout, 1).astype(jnp.float32)
    b2 = beta.reshape(Cout, 1).astype(jnp.float32)

    out3 = pl.pallas_call(
        conv1x1s2_bn_kernel,
        out_shape=jax.ShapeDtypeStruct((N, Cout, Ho * Wo), jnp.float32),
        in_specs=[
            pl.BlockSpec((N, Cin, H * W), lambda: (0, 0, 0)),
            pl.BlockSpec((H * W, Ho * Wo), lambda: (0, 0)),
            pl.BlockSpec((Cout, Cin), lambda: (0, 0)),
            pl.BlockSpec((Cout, 1), lambda: (0, 0)),
            pl.BlockSpec((Cout, 1), lambda: (0, 0)),
        ],
        out_specs=pl.BlockSpec((N, Cout, Ho * Wo), lambda: (0, 0, 0)),
    )(xf, sel, wt, g2, b2)

    return out3.reshape(N, Cout, Ho, Wo)                   # free metadata reshape (already NCHW)


conv_bn_forward_jit = jax.jit(conv_bn_forward)


def reference_forward(x, w, gamma, beta):
    """Pure-JAX reference with numerics matched to the kernel (bf16 matmul, f32 BN)."""
    xs = x[:, :, ::2, ::2].astype(jnp.bfloat16)
    wb = w.reshape(w.shape[0], w.shape[1]).astype(jnp.bfloat16)
    y = jnp.einsum('nchw,oc->nohw', xs, wb, preferred_element_type=jnp.float32)
    mean = jnp.mean(y, axis=(0, 2, 3), keepdims=True)
    var = jnp.mean((y - mean) ** 2, axis=(0, 2, 3), keepdims=True)
    return (y - mean) / jnp.sqrt(var + EPS) * gamma.reshape(1, -1, 1, 1) + beta.reshape(1, -1, 1, 1)


if __name__ == "__main__":
    key = jax.random.PRNGKey(0)
    k_x, k_w, k_g, k_b = jax.random.split(key, 4)

    # Channels fixed by the layer definitions (128 -> 288); small batch/spatial.
    N, Cin, H, W = 2, 128, 16, 16
    Cout = 288

    x = jax.random.normal(k_x, (N, Cin, H, W), dtype=jnp.float32)
    w = jax.random.normal(k_w, (Cout, Cin, 1, 1), dtype=jnp.float32) * 0.05
    gamma = 1.0 + 0.1 * jax.random.normal(k_g, (Cout,), dtype=jnp.float32)
    beta = 0.1 * jax.random.normal(k_b, (Cout,), dtype=jnp.float32)

    out = jax.block_until_ready(conv_bn_forward_jit(x, w, gamma, beta))
    ref = jax.block_until_ready(reference_forward(x, w, gamma, beta))

    assert out.shape == (N, Cout, (H + 1) // 2, (W + 1) // 2), out.shape
    assert jnp.allclose(out, ref, atol=1e-2, rtol=1e-2), float(jnp.max(jnp.abs(out - ref)))

    print("KERNEL_OK")
</pallas_src>

<mosaic_0001>
module attributes {stable_mosaic.version = 11 : i64} {
  func.func @conv1x1s2_bn_kernel(%arg0: memref<2x128x256xf32, #tpu.memory_space<vmem>>, %arg1: memref<256x64xbf16, #tpu.memory_space<vmem>>, %arg2: memref<288x128xbf16, #tpu.memory_space<vmem>>, %arg3: memref<288x1xf32, #tpu.memory_space<vmem>>, %arg4: memref<288x1xf32, #tpu.memory_space<vmem>>, %arg5: memref<2x288x64xf32, #tpu.memory_space<vmem>>) attributes {dimension_semantics = [], scalar_prefetch = 0 : i64, scratch_operands = 0 : i64, tpu.core_type = #tpu.core_type<tc>} {
    %c0 = arith.constant 0 : index
    %c0_0 = arith.constant 0 : index
    %0 = vector.load %arg1[%c0, %c0_0] : memref<256x64xbf16, #tpu.memory_space<vmem>>, vector<256x64xbf16>
    %c0_1 = arith.constant 0 : index
    %c0_2 = arith.constant 0 : index
    %1 = vector.load %arg2[%c0_1, %c0_2] : memref<288x128xbf16, #tpu.memory_space<vmem>>, vector<288x128xbf16>
    %cst = arith.constant 0.000000e+00 : f32
    %2 = vector.broadcast %cst : f32 to vector<288x1xf32>
    %cst_3 = arith.constant 0.000000e+00 : f32
    %3 = vector.broadcast %cst_3 : f32 to vector<288x1xf32>
    %c0_4 = arith.constant 0 : index
    %c0_5 = arith.constant 0 : index
    %c0_6 = arith.constant 0 : index
    %4 = vector.load %arg0[%c0_4, %c0_5, %c0_6] : memref<2x128x256xf32, #tpu.memory_space<vmem>>, vector<1x128x256xf32>
    %5 = vector.shape_cast %4 : vector<1x128x256xf32> to vector<128x256xf32>
    %6 = arith.truncf %5 : vector<128x256xf32> to vector<128x256xbf16>
    %cst_7 = arith.constant dense<0.000000e+00> : vector<128x64xf32>
    %7 = tpu.matmul %6, %0, %cst_7 {dimension_numbers = #tpu.dot_dimension_numbers<[1], [0], [0], [1], [0, 0, 1, 1], [], []>} : vector<128x256xbf16>, vector<256x64xbf16>, vector<128x64xf32> -> vector<128x64xf32>
    %8 = arith.truncf %7 : vector<128x64xf32> to vector<128x64xbf16>
    %cst_8 = arith.constant dense<0.000000e+00> : vector<288x64xf32>
    %9 = tpu.matmul %1, %8, %cst_8 {dimension_numbers = #tpu.dot_dimension_numbers<[1], [0], [0], [1], [0, 0, 1, 1], [], []>} : vector<288x128xbf16>, vector<128x64xbf16>, vector<288x64xf32> -> vector<288x64xf32>
    %cst_9 = arith.constant dense<0.000000e+00> : vector<288xf32>
    %10 = vector.multi_reduction <add>, %9, %cst_9 [1] : vector<288x64xf32> to vector<288xf32>
    %11 = vector.shape_cast %10 : vector<288xf32> to vector<288x1xf32>
    %12 = arith.addf %2, %11 : vector<288x1xf32>
    %13 = arith.mulf %9, %9 : vector<288x64xf32>
    %cst_10 = arith.constant dense<0.000000e+00> : vector<288xf32>
    %14 = vector.multi_reduction <add>, %13, %cst_10 [1] : vector<288x64xf32> to vector<288xf32>
    %15 = vector.shape_cast %14 : vector<288xf32> to vector<288x1xf32>
    %16 = arith.addf %3, %15 : vector<288x1xf32>
    %c1 = arith.constant 1 : index
    %c0_11 = arith.constant 0 : index
    %c0_12 = arith.constant 0 : index
    %17 = vector.load %arg0[%c1, %c0_11, %c0_12] : memref<2x128x256xf32, #tpu.memory_space<vmem>>, vector<1x128x256xf32>
    %18 = vector.shape_cast %17 : vector<1x128x256xf32> to vector<128x256xf32>
    %19 = arith.truncf %18 : vector<128x256xf32> to vector<128x256xbf16>
    %cst_13 = arith.constant dense<0.000000e+00> : vector<128x64xf32>
    %20 = tpu.matmul %19, %0, %cst_13 {dimension_numbers = #tpu.dot_dimension_numbers<[1], [0], [0], [1], [0, 0, 1, 1], [], []>} : vector<128x256xbf16>, vector<256x64xbf16>, vector<128x64xf32> -> vector<128x64xf32>
    %21 = arith.truncf %20 : vector<128x64xf32> to vector<128x64xbf16>
    %cst_14 = arith.constant dense<0.000000e+00> : vector<288x64xf32>
    %22 = tpu.matmul %1, %21, %cst_14 {dimension_numbers = #tpu.dot_dimension_numbers<[1], [0], [0], [1], [0, 0, 1, 1], [], []>} : vector<288x128xbf16>, vector<128x64xbf16>, vector<288x64xf32> -> vector<288x64xf32>
    %cst_15 = arith.constant dense<0.000000e+00> : vector<288xf32>
    %23 = vector.multi_reduction <add>, %22, %cst_15 [1] : vector<288x64xf32> to vector<288xf32>
    %24 = vector.shape_cast %23 : vector<288xf32> to vector<288x1xf32>
    %25 = arith.addf %12, %24 : vector<288x1xf32>
    %26 = arith.mulf %22, %22 : vector<288x64xf32>
    %cst_16 = arith.constant dense<0.000000e+00> : vector<288xf32>
    %27 = vector.multi_reduction <add>, %26, %cst_16 [1] : vector<288x64xf32> to vector<288xf32>
    %28 = vector.shape_cast %27 : vector<288xf32> to vector<288x1xf32>
    %29 = arith.addf %16, %28 : vector<288x1xf32>
    %cst_17 = arith.constant 7.812500e-03 : f32
    %30 = vector.broadcast %cst_17 : f32 to vector<288x1xf32>
    %31 = arith.mulf %25, %30 : vector<288x1xf32>
    %cst_18 = arith.constant 7.812500e-03 : f32
    %32 = vector.broadcast %cst_18 : f32 to vector<288x1xf32>
    %33 = arith.mulf %29, %32 : vector<288x1xf32>
    %34 = arith.mulf %31, %31 : vector<288x1xf32>
    %35 = arith.subf %33, %34 : vector<288x1xf32>
    %cst_19 = arith.constant 9.99999974E-6 : f32
    %36 = vector.broadcast %cst_19 : f32 to vector<288x1xf32>
    %37 = arith.addf %35, %36 : vector<288x1xf32>
    %38 = math.rsqrt %37 : vector<288x1xf32>
    %c0_20 = arith.constant 0 : index
    %c0_21 = arith.constant 0 : index
    %39 = vector.load %arg3[%c0_20, %c0_21] : memref<288x1xf32, #tpu.memory_space<vmem>>, vector<288x1xf32>
    %40 = arith.mulf %39, %38 : vector<288x1xf32>
    %c0_22 = arith.constant 0 : index
    %c0_23 = arith.constant 0 : index
    %41 = vector.load %arg4[%c0_22, %c0_23] : memref<288x1xf32, #tpu.memory_space<vmem>>, vector<288x1xf32>
    %42 = arith.mulf %31, %40 : vector<288x1xf32>
    %43 = arith.subf %41, %42 : vector<288x1xf32>
    %44 = vector.broadcast %40 : vector<288x1xf32> to vector<288x64xf32>
    %45 = arith.mulf %9, %44 : vector<288x64xf32>
    %46 = vector.broadcast %43 : vector<288x1xf32> to vector<288x64xf32>
    %47 = arith.addf %45, %46 : vector<288x64xf32>
    %c0_24 = arith.constant 0 : index
    %c0_25 = arith.constant 0 : index
    %c0_26 = arith.constant 0 : index
    %48 = vector.load %arg5[%c0_24, %c0_25, %c0_26] : memref<2x288x64xf32, #tpu.memory_space<vmem>>, vector<1x288x64xf32>
    %49 = vector.shape_cast %48 : vector<1x288x64xf32> to vector<288x64xf32>
    %50 = vector.shape_cast %47 : vector<288x64xf32> to vector<1x288x64xf32>
    tpu.vector_store %arg5[%c0_24, %c0_25, %c0_26], %50 {strides = array<i32>} : memref<2x288x64xf32, #tpu.memory_space<vmem>>, vector<1x288x64xf32>,
    %51 = vector.broadcast %40 : vector<288x1xf32> to vector<288x64xf32>
    %52 = arith.mulf %22, %51 : vector<288x64xf32>
    %53 = vector.broadcast %43 : vector<288x1xf32> to vector<288x64xf32>
    %54 = arith.addf %52, %53 : vector<288x64xf32>
    %c1_27 = arith.constant 1 : index
    %c0_28 = arith.constant 0 : index
    %c0_29 = arith.constant 0 : index
    %55 = vector.load %arg5[%c1_27, %c0_28, %c0_29] : memref<2x288x64xf32, #tpu.memory_space<vmem>>, vector<1x288x64xf32>
    %56 = vector.shape_cast %55 : vector<1x288x64xf32> to vector<288x64xf32>
    %57 = vector.shape_cast %54 : vector<288x64xf32> to vector<1x288x64xf32>
    tpu.vector_store %arg5[%c1_27, %c0_28, %c0_29], %57 {strides = array<i32>} : memref<2x288x64xf32, #tpu.memory_space<vmem>>, vector<1x288x64xf32>,
    return
  }
}

</mosaic_0001>

<llo_original>
// kernel: conv_bn_forward.1
$region0: #{conv_bn_forward.1}
  #allocation0 [shape = 'u32[]', space=smem, size = 0x4, offset = 0x4, fixed_abs, tag = 'smem constant byte address 0x4 - core index']
  #allocation1 [shape = 'u32[72,128]{1,0:T(1,128)}', space=vmem, size = 0x9000, scoped, tag = 'internal scratch']
  %s0 = inlined_call_operand.vmem [shape: f32[2,128,256], index: 0, kind: input, shape index: {}]
  %s1 = inlined_call_operand.vmem [shape: bf16[256,64], index: 1, kind: input, shape index: {}]
  %s2 = inlined_call_operand.vmem [shape: bf16[288,128], index: 2, kind: input, shape index: {}]
  %s3 = inlined_call_operand.vmem [shape: f32[288,1], index: 3, kind: input, shape index: {}]
  %s4 = inlined_call_operand.vmem [shape: f32[288,1], index: 4, kind: input, shape index: {}]
  %s5 = inlined_call_operand.vmem [shape: f32[2,288,64], index: 5, kind: output, shape index: {}]
  %s6 = sld [smem:[#allocation0]]
  $region30: #{conv_bn_forward.1} parent=0
    _
  %s8 = ssub.s32 1, %s6
  %s9 = scalar_select 0, %s8, %s6
  // Predicated region
  $region2: #{conv_bn_forward.1} parent=0 // pred_check
    _
  $region3: #{conv_bn_forward.1} parent=0 // pred_check_branch
    %11 = sbr.rel (0) target = $region5
  $region4: #{conv_bn_forward.1} parent=0 // pred_region
    _
  $region5: #{conv_bn_forward.1} parent=0 // pred_fallthru
    _
  // Predicated region
  $region6: #{conv_bn_forward.1} parent=0 // pred_check
    _
  $region7: #{conv_bn_forward.1} parent=0 // pred_check_branch
    %13 = sbr.rel (0) target = $region9
  $region8: #{conv_bn_forward.1} parent=0 // pred_region
    _
  $region9: #{conv_bn_forward.1} parent=0 // pred_fallthru
    _
  // Predicated region
  $region10: #{conv_bn_forward.1} parent=0 // pred_check
    _
  $region11: #{conv_bn_forward.1} parent=0 // pred_check_branch
    %15 = sbr.rel (0) target = $region13
  $region12: #{conv_bn_forward.1} parent=0 // pred_region
    _
  $region13: #{conv_bn_forward.1} parent=0 // pred_fallthru
    _
  // Predicated region
  $region14: #{conv_bn_forward.1} parent=0 // pred_check
    _
  $region15: #{conv_bn_forward.1} parent=0 // pred_check_branch
    %17 = sbr.rel (0) target = $region17
  $region16: #{conv_bn_forward.1} parent=0 // pred_region
    _
  $region17: #{conv_bn_forward.1} parent=0 // pred_fallthru
    _
  // Predicated region
  $region18: #{conv_bn_forward.1} parent=0 // pred_check
    _
  $region19: #{conv_bn_forward.1} parent=0 // pred_check_branch
    %19 = sbr.rel (0) target = $region21
  $region20: #{conv_bn_forward.1} parent=0 // pred_region
    _
  $region21: #{conv_bn_forward.1} parent=0 // pred_fallthru
    _
  %v20 = vld [vmem:[%s1] sm:$0xf]
  %v21 = vld [vmem:[%s1 + $0x4] sm:$0xf]
  %v22 = vld [vmem:[%s1 + $0x8] sm:$0xf]
  %v23 = vld [vmem:[%s1 + $0xc] sm:$0xf]
  %v24 = vld [vmem:[%s1 + $0x10] sm:$0xf]
  %v25 = vld [vmem:[%s1 + $0x14] sm:$0xf]
  %v26 = vld [vmem:[%s1 + $0x18] sm:$0xf]
  %v27 = vld [vmem:[%s1 + $0x1c] sm:$0xf]
  %v28 = vld [vmem:[%s1 + $0x20] sm:$0xf]
  %v29 = vld [vmem:[%s1 + $0x24] sm:$0xf]
  %v30 = vld [vmem:[%s1 + $0x28] sm:$0xf]
  %v31 = vld [vmem:[%s1 + $0x2c] sm:$0xf]
  %v32 = vld [vmem:[%s1 + $0x30] sm:$0xf]
  %v33 = vld [vmem:[%s1 + $0x34] sm:$0xf]
  %v34 = vld [vmem:[%s1 + $0x38] sm:$0xf]
  %v35 = vld [vmem:[%s1 + $0x3c] sm:$0xf]
  %v36 = vld [vmem:[%s1 + $0x40] sm:$0xf]
  %v37 = vld [vmem:[%s1 + $0x44] sm:$0xf]
  %v38 = vld [vmem:[%s1 + $0x48] sm:$0xf]
  %v39 = vld [vmem:[%s1 + $0x4c] sm:$0xf]
  %v40 = vld [vmem:[%s1 + $0x50] sm:$0xf]
  %v41 = vld [vmem:[%s1 + $0x54] sm:$0xf]
  %v42 = vld [vmem:[%s1 + $0x58] sm:$0xf]
  %v43 = vld [vmem:[%s1 + $0x5c] sm:$0xf]
  %v44 = vld [vmem:[%s1 + $0x60] sm:$0xf]
  %v45 = vld [vmem:[%s1 + $0x64] sm:$0xf]
  %v46 = vld [vmem:[%s1 + $0x68] sm:$0xf]
  %v47 = vld [vmem:[%s1 + $0x6c] sm:$0xf]
  %v48 = vld [vmem:[%s1 + $0x70] sm:$0xf]
  %v49 = vld [vmem:[%s1 + $0x74] sm:$0xf]
  %v50 = vld [vmem:[%s1 + $0x78] sm:$0xf]
  %v51 = vld [vmem:[%s1 + $0x7c] sm:$0xf]
  %v52 = vld [vmem:[%s2] sm:$0xf]
  %v53 = vld [vmem:[%s2 + $0x4] sm:$0xf]
  %v54 = vld [vmem:[%s2 + $0x8] sm:$0xf]
  %v55 = vld [vmem:[%s2 + $0xc] sm:$0xf]
  %v56 = vld [vmem:[%s2 + $0x10] sm:$0xf]
  %v57 = vld [vmem:[%s2 + $0x14] sm:$0xf]
  %v58 = vld [vmem:[%s2 + $0x18] sm:$0xf]
  %v59 = vld [vmem:[%s2 + $0x1c] sm:$0xf]
  %v60 = vld [vmem:[%s2 + $0x20] sm:$0xf]
  %v61 = vld [vmem:[%s2 + $0x24] sm:$0xf]
  %v62 = vld [vmem:[%s2 + $0x28] sm:$0xf]
  %v63 = vld [vmem:[%s2 + $0x2c] sm:$0xf]
  %v64 = vld [vmem:[%s2 + $0x30] sm:$0xf]
  %v65 = vld [vmem:[%s2 + $0x34] sm:$0xf]
  %v66 = vld [vmem:[%s2 + $0x38] sm:$0xf]
  %v67 = vld [vmem:[%s2 + $0x3c] sm:$0xf]
  %v68 = vld [vmem:[%s2 + $0x40] sm:$0xf]
  %v69 = vld [vmem:[%s2 + $0x44] sm:$0xf]
  %v70 = vld [vmem:[%s2 + $0x48] sm:$0xf]
  %v71 = vld [vmem:[%s2 + $0x4c] sm:$0xf]
  %v72 = vld [vmem:[%s2 + $0x50] sm:$0xf]
  %v73 = vld [vmem:[%s2 + $0x54] sm:$0xf]
  %v74 = vld [vmem:[%s2 + $0x58] sm:$0xf]
  %v75 = vld [vmem:[%s2 + $0x5c] sm:$0xf]
  %v76 = vld [vmem:[%s2 + $0x60] sm:$0xf]
  %v77 = vld [vmem:[%s2 + $0x64] sm:$0xf]
  %v78 = vld [vmem:[%s2 + $0x68] sm:$0xf]
  %v79 = vld [vmem:[%s2 + $0x6c] sm:$0xf]
  %v80 = vld [vmem:[%s2 + $0x70] sm:$0xf]
  %v81 = vld [vmem:[%s2 + $0x74] sm:$0xf]
  %v82 = vld [vmem:[%s2 + $0x78] sm:$0xf]
  %v83 = vld [vmem:[%s2 + $0x7c] sm:$0xf]
  %v84 = vld [vmem:[%s2 + $0x80] sm:$0xf]
  %v85 = vld [vmem:[%s2 + $0x84] sm:$0xf]
  %v86 = vld [vmem:[%s2 + $0x88] sm:$0xf]
  %v87 = vld [vmem:[%s2 + $0x8c] sm:$0xf]
  %v88 = vld [vmem:[%s0] sm:$0xff]
  %v89 = vld [vmem:[%s0 + $0x8] sm:$0xff]
  %v90 = vld [vmem:[%s0 + $0x10] sm:$0xff]
  %v91 = vld [vmem:[%s0 + $0x18] sm:$0xff]
  %v92 = vld [vmem:[%s0 + $0x20] sm:$0xff]
  %v93 = vld [vmem:[%s0 + $0x28] sm:$0xff]
  %v94 = vld [vmem:[%s0 + $0x30] sm:$0xff]
  %v95 = vld [vmem:[%s0 + $0x38] sm:$0xff]
  %v96 = vld [vmem:[%s0 + $0x40] sm:$0xff]
  %v97 = vld [vmem:[%s0 + $0x48] sm:$0xff]
  %v98 = vld [vmem:[%s0 + $0x50] sm:$0xff]
  %v99 = vld [vmem:[%s0 + $0x58] sm:$0xff]
  %v100 = vld [vmem:[%s0 + $0x60] sm:$0xff]
  %v101 = vld [vmem:[%s0 + $0x68] sm:$0xff]
  %v102 = vld [vmem:[%s0 + $0x70] sm:$0xff]
  %v103 = vld [vmem:[%s0 + $0x78] sm:$0xff]
  %v104 = vld [vmem:[%s0 + $0x80] sm:$0xff]
  %v105 = vld [vmem:[%s0 + $0x88] sm:$0xff]
  %v106 = vld [vmem:[%s0 + $0x90] sm:$0xff]
  %v107 = vld [vmem:[%s0 + $0x98] sm:$0xff]
  %v108 = vld [vmem:[%s0 + $0xa0] sm:$0xff]
  %v109 = vld [vmem:[%s0 + $0xa8] sm:$0xff]
  %v110 = vld [vmem:[%s0 + $0xb0] sm:$0xff]
  %v111 = vld [vmem:[%s0 + $0xb8] sm:$0xff]
  %v112 = vld [vmem:[%s0 + $0xc0] sm:$0xff]
  %v113 = vld [vmem:[%s0 + $0xc8] sm:$0xff]
  %v114 = vld [vmem:[%s0 + $0xd0] sm:$0xff]
  %v115 = vld [vmem:[%s0 + $0xd8] sm:$0xff]
  %v116 = vld [vmem:[%s0 + $0xe0] sm:$0xff]
  %v117 = vld [vmem:[%s0 + $0xe8] sm:$0xff]
  %v118 = vld [vmem:[%s0 + $0xf0] sm:$0xff]
  %v119 = vld [vmem:[%s0 + $0xf8] sm:$0xff]
  %v120 = vpack.c.bf16 %v90, %v88
  %v121 = vpack.c.bf16 %v91, %v89
  %v122 = vpack.c.bf16 %v94, %v92
  %v123 = vpack.c.bf16 %v95, %v93
  %v124 = vpack.c.bf16 %v98, %v96
  %v125 = vpack.c.bf16 %v99, %v97
  %v126 = vpack.c.bf16 %v102, %v100
  %v127 = vpack.c.bf16 %v103, %v101
  %v128 = vpack.c.bf16 %v106, %v104
  %v129 = vpack.c.bf16 %v107, %v105
  %v130 = vpack.c.bf16 %v110, %v108
  %v131 = vpack.c.bf16 %v111, %v109
  %v132 = vpack.c.bf16 %v114, %v112
  %v133 = vpack.c.bf16 %v115, %v113
  %v134 = vpack.c.bf16 %v118, %v116
  %v135 = vpack.c.bf16 %v119, %v117
  %v168 = vunpack.c.l.b16 %v20
  %v169 = vunpack.c.l.b16 %v21
  %v170 = vunpack.c.l.b16 %v22
  %v171 = vunpack.c.l.b16 %v23
  %v172 = vunpack.c.l.b16 %v24
  %v173 = vunpack.c.l.b16 %v25
  %v174 = vunpack.c.l.b16 %v26
  %v175 = vunpack.c.l.b16 %v27
  %v176 = vunpack.c.l.b16 %v28
  %v177 = vunpack.c.l.b16 %v29
  %v178 = vunpack.c.l.b16 %v30
  %v179 = vunpack.c.l.b16 %v31
  %v180 = vunpack.c.l.b16 %v32
  %v181 = vunpack.c.l.b16 %v33
  %v182 = vunpack.c.l.b16 %v34
  %v183 = vunpack.c.l.b16 %v35
  %v184 = vunpack.c.l.b16 %v36
  %v185 = vunpack.c.l.b16 %v37
  %v186 = vunpack.c.l.b16 %v38
  %v187 = vunpack.c.l.b16 %v39
  %v188 = vunpack.c.l.b16 %v40
  %v189 = vunpack.c.l.b16 %v41
  %v190 = vunpack.c.l.b16 %v42
  %v191 = vunpack.c.l.b16 %v43
  %v192 = vunpack.c.l.b16 %v44
  %v193 = vunpack.c.l.b16 %v45
  %v194 = vunpack.c.l.b16 %v46
  %v195 = vunpack.c.l.b16 %v47
  %v196 = vunpack.c.l.b16 %v48
  %v197 = vunpack.c.l.b16 %v49
  %v198 = vunpack.c.l.b16 %v50
  %v199 = vunpack.c.l.b16 %v51
  %v200 = vpack.c.b16 %v169, %v168
  %v201 = vpack.c.b16 %v171, %v170
  %v202 = vpack.c.b16 %v173, %v172
  %v203 = vpack.c.b16 %v175, %v174
  %v204 = vpack.c.b16 %v177, %v176
  %v205 = vpack.c.b16 %v179, %v178
  %v206 = vpack.c.b16 %v181, %v180
  %v207 = vpack.c.b16 %v183, %v182
  %v208 = vpack.c.b16 %v185, %v184
  %v209 = vpack.c.b16 %v187, %v186
  %v210 = vpack.c.b16 %v189, %v188
  %v211 = vpack.c.b16 %v191, %v190
  %v212 = vpack.c.b16 %v193, %v192
  %v213 = vpack.c.b16 %v195, %v194
  %v214 = vpack.c.b16 %v197, %v196
  %v215 = vpack.c.b16 %v199, %v198
  %232 = vmatpush.bf16.msra.mxu0 %v207
  %233 = vmatpush.bf16.msra.mxu0 %v206
  %234 = vmatpush.bf16.msra.mxu0 %v205
  %235 = vmatpush.bf16.msra.mxu0 %v204
  %236 = vmatpush.bf16.msra.mxu0 %v203
  %237 = vmatpush.bf16.msra.mxu0 %v202
  %238 = vmatpush.bf16.msra.mxu0 %v201
  %239 = vmatpush.bf16.msra.mxu0 %v200
  %240 = vmatmul.bf16.gmra.mxu0 %v120
  %v241 = vpop.f32.mrf.mxu0
  %v242 = vadd.f32 0.0, %v241
  %v243 = vpop.f32.mrf.mxu0
  %v244 = vadd.f32 0.0, %v243
  %245 = vmatmul.bf16.gmra.mxu0 %v122
  %v246 = vpop.f32.mrf.mxu0
  %v247 = vadd.f32 0.0, %v246
  %v248 = vpop.f32.mrf.mxu0
  %v249 = vadd.f32 0.0, %v248
  %250 = vmatmul.bf16.gmra.mxu0 %v124
  %v251 = vpop.f32.mrf.mxu0
  %v252 = vadd.f32 0.0, %v251
  %v253 = vpop.f32.mrf.mxu0
  %v254 = vadd.f32 0.0, %v253
  %255 = vmatmul.bf16.gmra.mxu0 %v126
  %v256 = vpop.f32.mrf.mxu0
  %v257 = vadd.f32 0.0, %v256
  %v258 = vpop.f32.mrf.mxu0
  %v259 = vadd.f32 0.0, %v258
  %260 = vmatmul.bf16.gmra.mxu0 %v128
  %v261 = vpop.f32.mrf.mxu0
  %v262 = vadd.f32 0.0, %v261
  %v263 = vpop.f32.mrf.mxu0
  %v264 = vadd.f32 0.0, %v263
  %265 = vmatmul.bf16.gmra.mxu0 %v130
  %v266 = vpop.f32.mrf.mxu0
  %v267 = vadd.f32 0.0, %v266
  %v268 = vpop.f32.mrf.mxu0
  %v269 = vadd.f32 0.0, %v268
  %270 = vmatmul.bf16.gmra.mxu0 %v132
  %v271 = vpop.f32.mrf.mxu0
  %v272 = vadd.f32 0.0, %v271
  %v273 = vpop.f32.mrf.mxu0
  %v274 = vadd.f32 0.0, %v273
  %275 = vmatmul.bf16.gmra.mxu0 %v134
  %v276 = vpop.f32.mrf.mxu0
  %v277 = vadd.f32 0.0, %v276
  %v278 = vpop.f32.mrf.mxu0
  %v279 = vadd.f32 0.0, %v278
  %280 = vdwg.mxu0
  %281 = vmatpush.bf16.msra.mxu0 %v215
  %282 = vmatpush.bf16.msra.mxu0 %v214
  %283 = vmatpush.bf16.msra.mxu0 %v213
  %284 = vmatpush.bf16.msra.mxu0 %v212
  %285 = vmatpush.bf16.msra.mxu0 %v211
  %286 = vmatpush.bf16.msra.mxu0 %v210
  %287 = vmatpush.bf16.msra.mxu0 %v209
  %288 = vmatpush.bf16.msra.mxu0 %v208
  %289 = vmatmul.bf16.gmra.mxu0 %v121
  %v290 = vpop.f32.mrf.mxu0
  %v291 = vadd.f32 %v242, %v290
  %v292 = vpop.f32.mrf.mxu0
  %v293 = vadd.f32 %v244, %v292
  %294 = vmatmul.bf16.gmra.mxu0 %v123
  %v295 = vpop.f32.mrf.mxu0
  %v296 = vadd.f32 %v247, %v295
  %v297 = vpop.f32.mrf.mxu0
  %v298 = vadd.f32 %v249, %v297
  %299 = vmatmul.bf16.gmra.mxu0 %v125
  %v300 = vpop.f32.mrf.mxu0
  %v301 = vadd.f32 %v252, %v300
  %v302 = vpop.f32.mrf.mxu0
  %v303 = vadd.f32 %v254, %v302
  %304 = vmatmul.bf16.gmra.mxu0 %v127
  %v305 = vpop.f32.mrf.mxu0
  %v306 = vadd.f32 %v257, %v305
  %v307 = vpop.f32.mrf.mxu0
  %v308 = vadd.f32 %v259, %v307
  %309 = vmatmul.bf16.gmra.mxu0 %v129
  %v310 = vpop.f32.mrf.mxu0
  %v311 = vadd.f32 %v262, %v310
  %v312 = vpop.f32.mrf.mxu0
  %v313 = vadd.f32 %v264, %v312
  %314 = vmatmul.bf16.gmra.mxu0 %v131
  %v315 = vpop.f32.mrf.mxu0
  %v316 = vadd.f32 %v267, %v315
  %v317 = vpop.f32.mrf.mxu0
  %v318 = vadd.f32 %v269, %v317
  %319 = vmatmul.bf16.gmra.mxu0 %v133
  %v320 = vpop.f32.mrf.mxu0
  %v321 = vadd.f32 %v272, %v320
  %v322 = vpop.f32.mrf.mxu0
  %v323 = vadd.f32 %v274, %v322
  %324 = vmatmul.bf16.gmra.mxu0 %v135
  %v325 = vpop.f32.mrf.mxu0
  %v326 = vadd.f32 %v277, %v325
  %v327 = vpop.f32.mrf.mxu0
  %v328 = vadd.f32 %v279, %v327
  %329 = vdwg.mxu0
  %v330 = vpack.c.bf16 %v293, %v291
  %v331 = vpack.c.bf16 %v298, %v296
  %v332 = vpack.c.bf16 %v303, %v301
  %v333 = vpack.c.bf16 %v308, %v306
  %v334 = vpack.c.bf16 %v313, %v311
  %v335 = vpack.c.bf16 %v318, %v316
  %v336 = vpack.c.bf16 %v323, %v321
  %v337 = vpack.c.bf16 %v328, %v326
  %v374 = vunpack.c.l.b16 %v52
  %v375 = vunpack.c.l.b16 %v53
  %v376 = vunpack.c.l.b16 %v54
  %v377 = vunpack.c.l.b16 %v55
  %v378 = vunpack.c.l.b16 %v56
  %v379 = vunpack.c.l.b16 %v57
  %v380 = vunpack.c.l.b16 %v58
  %v381 = vunpack.c.l.b16 %v59
  %v382 = vunpack.c.l.b16 %v60
  %v383 = vunpack.c.l.b16 %v61
  %v384 = vunpack.c.l.b16 %v62
  %v385 = vunpack.c.l.b16 %v63
  %v386 = vunpack.c.l.b16 %v64
  %v387 = vunpack.c.l.b16 %v65
  %v388 = vunpack.c.l.b16 %v66
  %v389 = vunpack.c.l.b16 %v67
  %v390 = vunpack.c.l.b16 %v68
  %v391 = vunpack.c.l.b16 %v69
  %v392 = vunpack.c.l.b16 %v70
  %v393 = vunpack.c.l.b16 %v71
  %v394 = vunpack.c.l.b16 %v72
  %v395 = vunpack.c.l.b16 %v73
  %v396 = vunpack.c.l.b16 %v74
  %v397 = vunpack.c.l.b16 %v75
  %v398 = vunpack.c.l.b16 %v76
  %v399 = vunpack.c.l.b16 %v77
  %v400 = vunpack.c.l.b16 %v78
  %v401 = vunpack.c.l.b16 %v79
  %v402 = vunpack.c.l.b16 %v80
  %v403 = vunpack.c.l.b16 %v81
  %v404 = vunpack.c.l.b16 %v82
  %v405 = vunpack.c.l.b16 %v83
  %v406 = vunpack.c.l.b16 %v84
  %v407 = vunpack.c.l.b16 %v85
  %v408 = vunpack.c.l.b16 %v86
  %v409 = vunpack.c.l.b16 %v87
  %v410 = vpack.c.b16 %v375, %v374
  %v411 = vpack.c.b16 %v377, %v376
  %v412 = vpack.c.b16 %v379, %v378
  %v413 = vpack.c.b16 %v381, %v380
  %v414 = vpack.c.b16 %v383, %v382
  %v415 = vpack.c.b16 %v385, %v384
  %v416 = vpack.c.b16 %v387, %v386
  %v417 = vpack.c.b16 %v389, %v388
  %v418 = vpack.c.b16 %v391, %v390
  %v419 = vpack.c.b16 %v393, %v392
  %v420 = vpack.c.b16 %v395, %v394
  %v421 = vpack.c.b16 %v397, %v396
  %v422 = vpack.c.b16 %v399, %v398
  %v423 = vpack.c.b16 %v401, %v400
  %v424 = vpack.c.b16 %v403, %v402
  %v425 = vpack.c.b16 %v405, %v404
  %v426 = vpack.c.b16 %v407, %v406
  %v427 = vpack.c.b16 %v409, %v408
  %446 = vmatpush.bf16.msra.mxu0 %v337
  %447 = vmatpush.bf16.msra.mxu0 %v336
  %448 = vmatpush.bf16.msra.mxu0 %v335
  %449 = vmatpush.bf16.msra.mxu0 %v334
  %450 = vmatpush.bf16.msra.mxu0 %v333
  %451 = vmatpush.bf16.msra.mxu0 %v332
  %452 = vmatpush.bf16.msra.mxu0 %v331
  %453 = vmatpush.bf16.msra.mxu0 %v330
  %454 = vmatmul.bf16.gmra.mxu0 %v410
  %v455 = vpop.f32.mrf.mxu0
  %v456 = vadd.f32 0.0, %v455
  %v457 = vpop.f32.mrf.mxu0
  %v458 = vadd.f32 0.0, %v457
  %459 = vmatmul.bf16.gmra.mxu0 %v411
  %v460 = vpop.f32.mrf.mxu0
  %v461 = vadd.f32 0.0, %v460
  %v462 = vpop.f32.mrf.mxu0
  %v463 = vadd.f32 0.0, %v462
  %464 = vmatmul.bf16.gmra.mxu0 %v412
  %v465 = vpop.f32.mrf.mxu0
  %v466 = vadd.f32 0.0, %v465
  %v467 = vpop.f32.mrf.mxu0
  %v468 = vadd.f32 0.0, %v467
  %469 = vmatmul.bf16.gmra.mxu0 %v413
  %v470 = vpop.f32.mrf.mxu0
  %v471 = vadd.f32 0.0, %v470
  %v472 = vpop.f32.mrf.mxu0
  %v473 = vadd.f32 0.0, %v472
  %474 = vmatmul.bf16.gmra.mxu0 %v414
  %v475 = vpop.f32.mrf.mxu0
  %v476 = vadd.f32 0.0, %v475
  %v477 = vpop.f32.mrf.mxu0
  %v478 = vadd.f32 0.0, %v477
  %479 = vmatmul.bf16.gmra.mxu0 %v415
  %v480 = vpop.f32.mrf.mxu0
  %v481 = vadd.f32 0.0, %v480
  %v482 = vpop.f32.mrf.mxu0
  %v483 = vadd.f32 0.0, %v482
  %484 = vmatmul.bf16.gmra.mxu0 %v416
  %v485 = vpop.f32.mrf.mxu0
  %v486 = vadd.f32 0.0, %v485
  %v487 = vpop.f32.mrf.mxu0
  %v488 = vadd.f32 0.0, %v487
  %489 = vmatmul.bf16.gmra.mxu0 %v417
  %v490 = vpop.f32.mrf.mxu0
  %v491 = vadd.f32 0.0, %v490
  %v492 = vpop.f32.mrf.mxu0
  %v493 = vadd.f32 0.0, %v492
  %494 = vmatmul.bf16.gmra.mxu0 %v418
  %v495 = vpop.f32.mrf.mxu0
  %v496 = vadd.f32 0.0, %v495
  %v497 = vpop.f32.mrf.mxu0
  %v498 = vadd.f32 0.0, %v497
  %499 = vmatmul.bf16.gmra.mxu0 %v419
  %v500 = vpop.f32.mrf.mxu0
  %v501 = vadd.f32 0.0, %v500
  %v502 = vpop.f32.mrf.mxu0
  %v503 = vadd.f32 0.0, %v502
  %504 = vmatmul.bf16.gmra.mxu0 %v420
  %v505 = vpop.f32.mrf.mxu0
  %v506 = vadd.f32 0.0, %v505
  %v507 = vpop.f32.mrf.mxu0
  %v508 = vadd.f32 0.0, %v507
  %509 = vmatmul.bf16.gmra.mxu0 %v421
  %v510 = vpop.f32.mrf.mxu0
  %v511 = vadd.f32 0.0, %v510
  %v512 = vpop.f32.mrf.mxu0
  %v513 = vadd.f32 0.0, %v512
  %514 = vmatmul.bf16.gmra.mxu0 %v422
  %v515 = vpop.f32.mrf.mxu0
  %v516 = vadd.f32 0.0, %v515
  %v517 = vpop.f32.mrf.mxu0
  %v518 = vadd.f32 0.0, %v517
  %519 = vmatmul.bf16.gmra.mxu0 %v423
  %v520 = vpop.f32.mrf.mxu0
  %v521 = vadd.f32 0.0, %v520
  %v522 = vpop.f32.mrf.mxu0
  %v523 = vadd.f32 0.0, %v522
  %524 = vmatmul.bf16.gmra.mxu0 %v424
  %v525 = vpop.f32.mrf.mxu0
  %v526 = vadd.f32 0.0, %v525
  %v527 = vpop.f32.mrf.mxu0
  %v528 = vadd.f32 0.0, %v527
  %529 = vmatmul.bf16.gmra.mxu0 %v425
  %v530 = vpop.f32.mrf.mxu0
  %v531 = vadd.f32 0.0, %v530
  %v532 = vpop.f32.mrf.mxu0
  %v533 = vadd.f32 0.0, %v532
  %534 = vmatmul.bf16.gmra.mxu0 %v426
  %v535 = vpop.f32.mrf.mxu0
  %v536 = vadd.f32 0.0, %v535
  %v537 = vpop.f32.mrf.mxu0
  %v538 = vadd.f32 0.0, %v537
  %539 = vmatmul.bf16.gmra.mxu0 %v427
  %v540 = vpop.f32.mrf.mxu0
  %v541 = vadd.f32 0.0, %v540
  %v542 = vpop.f32.mrf.mxu0
  %v543 = vadd.f32 0.0, %v542
  %544 = vdwg.mxu0
  %vm545 = vcmask 523264
  %v546 = vsel %vm545, %v456, 0.0
  %547 = vadd.xlane.f32.xlu0 %v546
  %v548 = vpop.xlane.xlu0 %547
  %v549 = vsel %vm545, %v458, 0.0
  %550 = vadd.xlane.f32.xlu0 %v549
  %v551 = vpop.xlane.xlu0 %550
  %v552 = vsel %vm545, %v461, 0.0
  %553 = vadd.xlane.f32.xlu0 %v552
  %v554 = vpop.xlane.xlu0 %553
  %v555 = vsel %vm545, %v463, 0.0
  %556 = vadd.xlane.f32.xlu0 %v555
  %v557 = vpop.xlane.xlu0 %556
  %v558 = vsel %vm545, %v466, 0.0
  %559 = vadd.xlane.f32.xlu0 %v558
  %v560 = vpop.xlane.xlu0 %559
  %v561 = vsel %vm545, %v468, 0.0
  %562 = vadd.xlane.f32.xlu0 %v561
  %v563 = vpop.xlane.xlu0 %562
  %v564 = vsel %vm545, %v471, 0.0
  %565 = vadd.xlane.f32.xlu0 %v564
  %v566 = vpop.xlane.xlu0 %565
  %v567 = vsel %vm545, %v473, 0.0
  %568 = vadd.xlane.f32.xlu0 %v567
  %v569 = vpop.xlane.xlu0 %568
  %v570 = vsel %vm545, %v476, 0.0
  %571 = vadd.xlane.f32.xlu0 %v570
  %v572 = vpop.xlane.xlu0 %571
  %v573 = vsel %vm545, %v478, 0.0
  %574 = vadd.xlane.f32.xlu0 %v573
  %v575 = vpop.xlane.xlu0 %574
  %v576 = vsel %vm545, %v481, 0.0
  %577 = vadd.xlane.f32.xlu0 %v576
  %v578 = vpop.xlane.xlu0 %577
  %v579 = vsel %vm545, %v483, 0.0
  %580 = vadd.xlane.f32.xlu0 %v579
  %v581 = vpop.xlane.xlu0 %580
  %v582 = vsel %vm545, %v486, 0.0
  %583 = vadd.xlane.f32.xlu0 %v582
  %v584 = vpop.xlane.xlu0 %583
  %v585 = vsel %vm545, %v488, 0.0
  %586 = vadd.xlane.f32.xlu0 %v585
  %v587 = vpop.xlane.xlu0 %586
  %v588 = vsel %vm545, %v491, 0.0
  %589 = vadd.xlane.f32.xlu0 %v588
  %v590 = vpop.xlane.xlu0 %589
  %v591 = vsel %vm545, %v493, 0.0
  %592 = vadd.xlane.f32.xlu0 %v591
  %v593 = vpop.xlane.xlu0 %592
  %v594 = vsel %vm545, %v496, 0.0
  %595 = vadd.xlane.f32.xlu0 %v594
  %v596 = vpop.xlane.xlu0 %595
  %v597 = vsel %vm545, %v498, 0.0
  %598 = vadd.xlane.f32.xlu0 %v597
  %v599 = vpop.xlane.xlu0 %598
  %v600 = vsel %vm545, %v501, 0.0
  %601 = vadd.xlane.f32.xlu0 %v600
  %v602 = vpop.xlane.xlu0 %601
  %v603 = vsel %vm545, %v503, 0.0
  %604 = vadd.xlane.f32.xlu0 %v603
  %v605 = vpop.xlane.xlu0 %604
  %v606 = vsel %vm545, %v506, 0.0
  %607 = vadd.xlane.f32.xlu0 %v606
  %v608 = vpop.xlane.xlu0 %607
  %v609 = vsel %vm545, %v508, 0.0
  %610 = vadd.xlane.f32.xlu0 %v609
  %v611 = vpop.xlane.xlu0 %610
  %v612 = vsel %vm545, %v511, 0.0
  %613 = vadd.xlane.f32.xlu0 %v612
  %v614 = vpop.xlane.xlu0 %613
  %v615 = vsel %vm545, %v513, 0.0
  %616 = vadd.xlane.f32.xlu0 %v615
  %v617 = vpop.xlane.xlu0 %616
  %v618 = vsel %vm545, %v516, 0.0
  %619 = vadd.xlane.f32.xlu0 %v618
  %v620 = vpop.xlane.xlu0 %619
  %v621 = vsel %vm545, %v518, 0.0
  %622 = vadd.xlane.f32.xlu0 %v621
  %v623 = vpop.xlane.xlu0 %622
  %v624 = vsel %vm545, %v521, 0.0
  %625 = vadd.xlane.f32.xlu0 %v624
  %v626 = vpop.xlane.xlu0 %625
  %v627 = vsel %vm545, %v523, 0.0
  %628 = vadd.xlane.f32.xlu0 %v627
  %v629 = vpop.xlane.xlu0 %628
  %v630 = vsel %vm545, %v526, 0.0
  %631 = vadd.xlane.f32.xlu0 %v630
  %v632 = vpop.xlane.xlu0 %631
  %v633 = vsel %vm545, %v528, 0.0
  %634 = vadd.xlane.f32.xlu0 %v633
  %v635 = vpop.xlane.xlu0 %634
  %v636 = vsel %vm545, %v531, 0.0
  %637 = vadd.xlane.f32.xlu0 %v636
  %v638 = vpop.xlane.xlu0 %637
  %v639 = vsel %vm545, %v533, 0.0
  %640 = vadd.xlane.f32.xlu0 %v639
  %v641 = vpop.xlane.xlu0 %640
  %v642 = vsel %vm545, %v536, 0.0
  %643 = vadd.xlane.f32.xlu0 %v642
  %v644 = vpop.xlane.xlu0 %643
  %v645 = vsel %vm545, %v538, 0.0
  %646 = vadd.xlane.f32.xlu0 %v645
  %v647 = vpop.xlane.xlu0 %646
  %v648 = vsel %vm545, %v541, 0.0
  %649 = vadd.xlane.f32.xlu0 %v648
  %v650 = vpop.xlane.xlu0 %649
  %v651 = vsel %vm545, %v543, 0.0
  %652 = vadd.xlane.f32.xlu0 %v651
  %v653 = vpop.xlane.xlu0 %652
  %v654 = vadd.f32 %v548, 0.0
  %v655 = vadd.f32 %v551, 0.0
  %v656 = vadd.f32 %v554, 0.0
  %v657 = vadd.f32 %v557, 0.0
  %v658 = vadd.f32 %v560, 0.0
  %v659 = vadd.f32 %v563, 0.0
  %v660 = vadd.f32 %v566, 0.0
  %v661 = vadd.f32 %v569, 0.0
  %v662 = vadd.f32 %v572, 0.0
  %v663 = vadd.f32 %v575, 0.0
  %v664 = vadd.f32 %v578, 0.0
  %v665 = vadd.f32 %v581, 0.0
  %v666 = vadd.f32 %v584, 0.0
  %v667 = vadd.f32 %v587, 0.0
  %v668 = vadd.f32 %v590, 0.0
  %v669 = vadd.f32 %v593, 0.0
  %v670 = vadd.f32 %v596, 0.0
  %v671 = vadd.f32 %v599, 0.0
  %v672 = vadd.f32 %v602, 0.0
  %v673 = vadd.f32 %v605, 0.0
  %v674 = vadd.f32 %v608, 0.0
  %v675 = vadd.f32 %v611, 0.0
  %v676 = vadd.f32 %v614, 0.0
  %v677 = vadd.f32 %v617, 0.0
  %v678 = vadd.f32 %v620, 0.0
  %v679 = vadd.f32 %v623, 0.0
  %v680 = vadd.f32 %v626, 0.0
  %v681 = vadd.f32 %v629, 0.0
  %v682 = vadd.f32 %v632, 0.0
  %v683 = vadd.f32 %v635, 0.0
  %v684 = vadd.f32 %v638, 0.0
  %v685 = vadd.f32 %v641, 0.0
  %v686 = vadd.f32 %v644, 0.0
  %v687 = vadd.f32 %v647, 0.0
  %v688 = vadd.f32 %v650, 0.0
  %v689 = vadd.f32 %v653, 0.0
  %v690 = vmul.f32 %v456, %v456
  %v691 = vmul.f32 %v458, %v458
  %v692 = vmul.f32 %v461, %v461
  %v693 = vmul.f32 %v463, %v463
  %v694 = vmul.f32 %v466, %v466
  %v695 = vmul.f32 %v468, %v468
  %v696 = vmul.f32 %v471, %v471
  %v697 = vmul.f32 %v473, %v473
  %v698 = vmul.f32 %v476, %v476
  %v699 = vmul.f32 %v478, %v478
  %v700 = vmul.f32 %v481, %v481
  %v701 = vmul.f32 %v483, %v483
  %v702 = vmul.f32 %v486, %v486
  %v703 = vmul.f32 %v488, %v488
  %v704 = vmul.f32 %v491, %v491
  %v705 = vmul.f32 %v493, %v493
  %v706 = vmul.f32 %v496, %v496
  %v707 = vmul.f32 %v498, %v498
  %v708 = vmul.f32 %v501, %v501
  %v709 = vmul.f32 %v503, %v503
  %v710 = vmul.f32 %v506, %v506
  %v711 = vmul.f32 %v508, %v508
  %v712 = vmul.f32 %v511, %v511
  %v713 = vmul.f32 %v513, %v513
  %v714 = vmul.f32 %v516, %v516
  %v715 = vmul.f32 %v518, %v518
  %v716 = vmul.f32 %v521, %v521
  %v717 = vmul.f32 %v523, %v523
  %v718 = vmul.f32 %v526, %v526
  %v719 = vmul.f32 %v528, %v528
  %v720 = vmul.f32 %v531, %v531
  %v721 = vmul.f32 %v533, %v533
  %v722 = vmul.f32 %v536, %v536
  %v723 = vmul.f32 %v538, %v538
  %v724 = vmul.f32 %v541, %v541
  %v725 = vmul.f32 %v543, %v543
  %v726 = vsel %vm545, %v690, 0.0
  %727 = vadd.xlane.f32.xlu0 %v726
  %v728 = vpop.xlane.xlu0 %727
  %v729 = vsel %vm545, %v691, 0.0
  %730 = vadd.xlane.f32.xlu0 %v729
  %v731 = vpop.xlane.xlu0 %730
  %v732 = vsel %vm545, %v692, 0.0
  %733 = vadd.xlane.f32.xlu0 %v732
  %v734 = vpop.xlane.xlu0 %733
  %v735 = vsel %vm545, %v693, 0.0
  %736 = vadd.xlane.f32.xlu0 %v735
  %v737 = vpop.xlane.xlu0 %736
  %v738 = vsel %vm545, %v694, 0.0
  %739 = vadd.xlane.f32.xlu0 %v738
  %v740 = vpop.xlane.xlu0 %739
  %v741 = vsel %vm545, %v695, 0.0
  %742 = vadd.xlane.f32.xlu0 %v741
  %v743 = vpop.xlane.xlu0 %742
  %v744 = vsel %vm545, %v696, 0.0
  %745 = vadd.xlane.f32.xlu0 %v744
  %v746 = vpop.xlane.xlu0 %745
  %v747 = vsel %vm545, %v697, 0.0
  %748 = vadd.xlane.f32.xlu0 %v747
  %v749 = vpop.xlane.xlu0 %748
  %v750 = vsel %vm545, %v698, 0.0
  %751 = vadd.xlane.f32.xlu0 %v750
  %v752 = vpop.xlane.xlu0 %751
  %v753 = vsel %vm545, %v699, 0.0
  %754 = vadd.xlane.f32.xlu0 %v753
  %v755 = vpop.xlane.xlu0 %754
  %v756 = vsel %vm545, %v700, 0.0
  %757 = vadd.xlane.f32.xlu0 %v756
  %v758 = vpop.xlane.xlu0 %757
  %v759 = vsel %vm545, %v701, 0.0
  %760 = vadd.xlane.f32.xlu0 %v759
  %v761 = vpop.xlane.xlu0 %760
  %v762 = vsel %vm545, %v702, 0.0
  %763 = vadd.xlane.f32.xlu0 %v762
  %v764 = vpop.xlane.xlu0 %763
  %v765 = vsel %vm545, %v703, 0.0
  %766 = vadd.xlane.f32.xlu0 %v765
  %v767 = vpop.xlane.xlu0 %766
  %v768 = vsel %vm545, %v704, 0.0
  %769 = vadd.xlane.f32.xlu0 %v768
  %v770 = vpop.xlane.xlu0 %769
  %v771 = vsel %vm545, %v705, 0.0
  %772 = vadd.xlane.f32.xlu0 %v771
  %v773 = vpop.xlane.xlu0 %772
  %v774 = vsel %vm545, %v706, 0.0
  %775 = vadd.xlane.f32.xlu0 %v774
  %v776 = vpop.xlane.xlu0 %775
  %v777 = vsel %vm545, %v707, 0.0
  %778 = vadd.xlane.f32.xlu0 %v777
  %v779 = vpop.xlane.xlu0 %778
  %v780 = vsel %vm545, %v708, 0.0
  %781 = vadd.xlane.f32.xlu0 %v780
  %v782 = vpop.xlane.xlu0 %781
  %v783 = vsel %vm545, %v709, 0.0
  %784 = vadd.xlane.f32.xlu0 %v783
  %v785 = vpop.xlane.xlu0 %784
  %v786 = vsel %vm545, %v710, 0.0
  %787 = vadd.xlane.f32.xlu0 %v786
  %v788 = vpop.xlane.xlu0 %787
  %v789 = vsel %vm545, %v711, 0.0
  %790 = vadd.xlane.f32.xlu0 %v789
  %v791 = vpop.xlane.xlu0 %790
  %v792 = vsel %vm545, %v712, 0.0
  %793 = vadd.xlane.f32.xlu0 %v792
  %v794 = vpop.xlane.xlu0 %793
  %v795 = vsel %vm545, %v713, 0.0
  %796 = vadd.xlane.f32.xlu0 %v795
  %v797 = vpop.xlane.xlu0 %796
  %v798 = vsel %vm545, %v714, 0.0
  %799 = vadd.xlane.f32.xlu0 %v798
  %v800 = vpop.xlane.xlu0 %799
  %v801 = vsel %vm545, %v715, 0.0
  %802 = vadd.xlane.f32.xlu0 %v801
  %v803 = vpop.xlane.xlu0 %802
  %v804 = vsel %vm545, %v716, 0.0
  %805 = vadd.xlane.f32.xlu0 %v804
  %v806 = vpop.xlane.xlu0 %805
  %v807 = vsel %vm545, %v717, 0.0
  %808 = vadd.xlane.f32.xlu0 %v807
  %v809 = vpop.xlane.xlu0 %808
  %v810 = vsel %vm545, %v718, 0.0
  %811 = vadd.xlane.f32.xlu0 %v810
  %v812 = vpop.xlane.xlu0 %811
  %v813 = vsel %vm545, %v719, 0.0
  %814 = vadd.xlane.f32.xlu0 %v813
  %v815 = vpop.xlane.xlu0 %814
  %v816 = vsel %vm545, %v720, 0.0
  %817 = vadd.xlane.f32.xlu0 %v816
  %v818 = vpop.xlane.xlu0 %817
  %v819 = vsel %vm545, %v721, 0.0
  %820 = vadd.xlane.f32.xlu0 %v819
  %v821 = vpop.xlane.xlu0 %820
  %v822 = vsel %vm545, %v722, 0.0
  %823 = vadd.xlane.f32.xlu0 %v822
  %v824 = vpop.xlane.xlu0 %823
  %v825 = vsel %vm545, %v723, 0.0
  %826 = vadd.xlane.f32.xlu0 %v825
  %v827 = vpop.xlane.xlu0 %826
  %v828 = vsel %vm545, %v724, 0.0
  %829 = vadd.xlane.f32.xlu0 %v828
  %v830 = vpop.xlane.xlu0 %829
  %v831 = vsel %vm545, %v725, 0.0
  %832 = vadd.xlane.f32.xlu0 %v831
  %v833 = vpop.xlane.xlu0 %832
  %v834 = vadd.f32 %v728, 0.0
  %v835 = vadd.f32 %v731, 0.0
  %v836 = vadd.f32 %v734, 0.0
  %v837 = vadd.f32 %v737, 0.0
  %v838 = vadd.f32 %v740, 0.0
  %v839 = vadd.f32 %v743, 0.0
  %v840 = vadd.f32 %v746, 0.0
  %v841 = vadd.f32 %v749, 0.0
  %v842 = vadd.f32 %v752, 0.0
  %v843 = vadd.f32 %v755, 0.0
  %v844 = vadd.f32 %v758, 0.0
  %v845 = vadd.f32 %v761, 0.0
  %v846 = vadd.f32 %v764, 0.0
  %v847 = vadd.f32 %v767, 0.0
  %v848 = vadd.f32 %v770, 0.0
  %v849 = vadd.f32 %v773, 0.0
  %v850 = vadd.f32 %v776, 0.0
  %v851 = vadd.f32 %v779, 0.0
  %v852 = vadd.f32 %v782, 0.0
  %v853 = vadd.f32 %v785, 0.0
  %v854 = vadd.f32 %v788, 0.0
  %v855 = vadd.f32 %v791, 0.0
  %v856 = vadd.f32 %v794, 0.0
  %v857 = vadd.f32 %v797, 0.0
  %v858 = vadd.f32 %v800, 0.0
  %v859 = vadd.f32 %v803, 0.0
  %v860 = vadd.f32 %v806, 0.0
  %v861 = vadd.f32 %v809, 0.0
  %v862 = vadd.f32 %v812, 0.0
  %v863 = vadd.f32 %v815, 0.0
  %v864 = vadd.f32 %v818, 0.0
  %v865 = vadd.f32 %v821, 0.0
  %v866 = vadd.f32 %v824, 0.0
  %v867 = vadd.f32 %v827, 0.0
  %v868 = vadd.f32 %v830, 0.0
  %v869 = vadd.f32 %v833, 0.0
  %s870 = scalar_lea.vmem %s0, 256
  %v871 = vld [vmem:[%s870] sm:$0xff]
  %v872 = vld [vmem:[%s870 + $0x8] sm:$0xff]
  %v873 = vld [vmem:[%s870 + $0x10] sm:$0xff]
  %v874 = vld [vmem:[%s870 + $0x18] sm:$0xff]
  %v875 = vld [vmem:[%s870 + $0x20] sm:$0xff]
  %v876 = vld [vmem:[%s870 + $0x28] sm:$0xff]
  %v877 = vld [vmem:[%s870 + $0x30] sm:$0xff]
  %v878 = vld [vmem:[%s870 + $0x38] sm:$0xff]
  %v879 = vld [vmem:[%s870 + $0x40] sm:$0xff]
  %v880 = vld [vmem:[%s870 + $0x48] sm:$0xff]
  %v881 = vld [vmem:[%s870 + $0x50] sm:$0xff]
  %v882 = vld [vmem:[%s870 + $0x58] sm:$0xff]
  %v883 = vld [vmem:[%s870 + $0x60] sm:$0xff]
  %v884 = vld [vmem:[%s870 + $0x68] sm:$0xff]
  %v885 = vld [vmem:[%s870 + $0x70] sm:$0xff]
  %v886 = vld [vmem:[%s870 + $0x78] sm:$0xff]
  %v887 = vld [vmem:[%s870 + $0x80] sm:$0xff]
  %v888 = vld [vmem:[%s870 + $0x88] sm:$0xff]
  %v889 = vld [vmem:[%s870 + $0x90] sm:$0xff]
  %v890 = vld [vmem:[%s870 + $0x98] sm:$0xff]
  %v891 = vld [vmem:[%s870 + $0xa0] sm:$0xff]
  %v892 = vld [vmem:[%s870 + $0xa8] sm:$0xff]
  %v893 = vld [vmem:[%s870 + $0xb0] sm:$0xff]
  %v894 = vld [vmem:[%s870 + $0xb8] sm:$0xff]
  %v895 = vld [vmem:[%s870 + $0xc0] sm:$0xff]
  %v896 = vld [vmem:[%s870 + $0xc8] sm:$0xff]
  %v897 = vld [vmem:[%s870 + $0xd0] sm:$0xff]
  %v898 = vld [vmem:[%s870 + $0xd8] sm:$0xff]
  %v899 = vld [vmem:[%s870 + $0xe0] sm:$0xff]
  %v900 = vld [vmem:[%s870 + $0xe8] sm:$0xff]
  %v901 = vld [vmem:[%s870 + $0xf0] sm:$0xff]
  %v902 = vld [vmem:[%s870 + $0xf8] sm:$0xff]
  %v903 = vpack.c.bf16 %v873, %v871
  %v904 = vpack.c.bf16 %v874, %v872
  %v905 = vpack.c.bf16 %v877, %v875
  %v906 = vpack.c.bf16 %v878, %v876
  %v907 = vpack.c.bf16 %v881, %v879
  %v908 = vpack.c.bf16 %v882, %v880
  %v909 = vpack.c.bf16 %v885, %v883
  %v910 = vpack.c.bf16 %v886, %v884
  %v911 = vpack.c.bf16 %v889, %v887
  %v912 = vpack.c.bf16 %v890, %v888
  %v913 = vpack.c.bf16 %v893, %v891
  %v914 = vpack.c.bf16 %v894, %v892
  %v915 = vpack.c.bf16 %v897, %v895
  %v916 = vpack.c.bf16 %v898, %v896
  %v917 = vpack.c.bf16 %v901, %v899
  %v918 = vpack.c.bf16 %v902, %v900
  %919 = vmatpush.bf16.msra.mxu0 %v207
  %920 = vmatpush.bf16.msra.mxu0 %v206
  %921 = vmatpush.bf16.msra.mxu0 %v205
  %922 = vmatpush.bf16.msra.mxu0 %v204
  %923 = vmatpush.bf16.msra.mxu0 %v203
  %924 = vmatpush.bf16.msra.mxu0 %v202
  %925 = vmatpush.bf16.msra.mxu0 %v201
  %926 = vmatpush.bf16.msra.mxu0 %v200
  %927 = vmatmul.bf16.gmra.mxu0 %v903
  %v928 = vpop.f32.mrf.mxu0
  %v929 = vadd.f32 0.0, %v928
  %v930 = vpop.f32.mrf.mxu0
  %v931 = vadd.f32 0.0, %v930
  %932 = vmatmul.bf16.gmra.mxu0 %v905
  %v933 = vpop.f32.mrf.mxu0
  %v934 = vadd.f32 0.0, %v933
  %v935 = vpop.f32.mrf.mxu0
  %v936 = vadd.f32 0.0, %v935
  %937 = vmatmul.bf16.gmra.mxu0 %v907
  %v938 = vpop.f32.mrf.mxu0
  %v939 = vadd.f32 0.0, %v938
  %v940 = vpop.f32.mrf.mxu0
  %v941 = vadd.f32 0.0, %v940
  %942 = vmatmul.bf16.gmra.mxu0 %v909
  %v943 = vpop.f32.mrf.mxu0
  %v944 = vadd.f32 0.0, %v943
  %v945 = vpop.f32.mrf.mxu0
  %v946 = vadd.f32 0.0, %v945
  %947 = vmatmul.bf16.gmra.mxu0 %v911
  %v948 = vpop.f32.mrf.mxu0
  %v949 = vadd.f32 0.0, %v948
  %v950 = vpop.f32.mrf.mxu0
  %v951 = vadd.f32 0.0, %v950
  %952 = vmatmul.bf16.gmra.mxu0 %v913
  %v953 = vpop.f32.mrf.mxu0
  %v954 = vadd.f32 0.0, %v953
  %v955 = vpop.f32.mrf.mxu0
  %v956 = vadd.f32 0.0, %v955
  %957 = vmatmul.bf16.gmra.mxu0 %v915
  %v958 = vpop.f32.mrf.mxu0
  %v959 = vadd.f32 0.0, %v958
  %v960 = vpop.f32.mrf.mxu0
  %v961 = vadd.f32 0.0, %v960
  %962 = vmatmul.bf16.gmra.mxu0 %v917
  %v963 = vpop.f32.mrf.mxu0
  %v964 = vadd.f32 0.0, %v963
  %v965 = vpop.f32.mrf.mxu0
  %v966 = vadd.f32 0.0, %v965
  %967 = vdwg.mxu0
  %968 = vmatpush.bf16.msra.mxu0 %v215
  %969 = vmatpush.bf16.msra.mxu0 %v214
  %970 = vmatpush.bf16.msra.mxu0 %v213
  %971 = vmatpush.bf16.msra.mxu0 %v212
  %972 = vmatpush.bf16.msra.mxu0 %v211
  %973 = vmatpush.bf16.msra.mxu0 %v210
  %974 = vmatpush.bf16.msra.mxu0 %v209
  %975 = vmatpush.bf16.msra.mxu0 %v208
  %976 = vmatmul.bf16.gmra.mxu0 %v904
  %v977 = vpop.f32.mrf.mxu0
  %v978 = vadd.f32 %v929, %v977
  %v979 = vpop.f32.mrf.mxu0
  %v980 = vadd.f32 %v931, %v979
  %981 = vmatmul.bf16.gmra.mxu0 %v906
  %v982 = vpop.f32.mrf.mxu0
  %v983 = vadd.f32 %v934, %v982
  %v984 = vpop.f32.mrf.mxu0
  %v985 = vadd.f32 %v936, %v984
  %986 = vmatmul.bf16.gmra.mxu0 %v908
  %v987 = vpop.f32.mrf.mxu0
  %v988 = vadd.f32 %v939, %v987
  %v989 = vpop.f32.mrf.mxu0
  %v990 = vadd.f32 %v941, %v989
  %991 = vmatmul.bf16.gmra.mxu0 %v910
  %v992 = vpop.f32.mrf.mxu0
  %v993 = vadd.f32 %v944, %v992
  %v994 = vpop.f32.mrf.mxu0
  %v995 = vadd.f32 %v946, %v994
  %996 = vmatmul.bf16.gmra.mxu0 %v912
  %v997 = vpop.f32.mrf.mxu0
  %v998 = vadd.f32 %v949, %v997
  %v999 = vpop.f32.mrf.mxu0
  %v1000 = vadd.f32 %v951, %v999
  %1001 = vmatmul.bf16.gmra.mxu0 %v914
  %v1002 = vpop.f32.mrf.mxu0
  %v1003 = vadd.f32 %v954, %v1002
  %v1004 = vpop.f32.mrf.mxu0
  %v1005 = vadd.f32 %v956, %v1004
  %1006 = vmatmul.bf16.gmra.mxu0 %v916
  %v1007 = vpop.f32.mrf.mxu0
  %v1008 = vadd.f32 %v959, %v1007
  %v1009 = vpop.f32.mrf.mxu0
  %v1010 = vadd.f32 %v961, %v1009
  %1011 = vmatmul.bf16.gmra.mxu0 %v918
  %v1012 = vpop.f32.mrf.mxu0
  %v1013 = vadd.f32 %v964, %v1012
  %v1014 = vpop.f32.mrf.mxu0
  %v1015 = vadd.f32 %v966, %v1014
  %1016 = vdwg.mxu0
  %v1017 = vpack.c.bf16 %v980, %v978
  %v1018 = vpack.c.bf16 %v985, %v983
  %v1019 = vpack.c.bf16 %v990, %v988
  %v1020 = vpack.c.bf16 %v995, %v993
  %v1021 = vpack.c.bf16 %v1000, %v998
  %v1022 = vpack.c.bf16 %v1005, %v1003
  %v1023 = vpack.c.bf16 %v1010, %v1008
  %v1024 = vpack.c.bf16 %v1015, %v1013
  %1025 = vmatpush.bf16.msra.mxu0 %v1024
  %1026 = vmatpush.bf16.msra.mxu0 %v1023
  %1027 = vmatpush.bf16.msra.mxu0 %v1022
  %1028 = vmatpush.bf16.msra.mxu0 %v1021
  %1029 = vmatpush.bf16.msra.mxu0 %v1020
  %1030 = vmatpush.bf16.msra.mxu0 %v1019
  %1031 = vmatpush.bf16.msra.mxu0 %v1018
  %1032 = vmatpush.bf16.msra.mxu0 %v1017
  %1033 = vmatmul.bf16.gmra.mxu0 %v410
  %v1034 = vpop.f32.mrf.mxu0
  %v1035 = vadd.f32 0.0, %v1034
  %v1036 = vpop.f32.mrf.mxu0
  %v1037 = vadd.f32 0.0, %v1036
  %1038 = vmatmul.bf16.gmra.mxu0 %v411
  %v1039 = vpop.f32.mrf.mxu0
  %v1040 = vadd.f32 0.0, %v1039
  %v1041 = vpop.f32.mrf.mxu0
  %v1042 = vadd.f32 0.0, %v1041
  %1043 = vmatmul.bf16.gmra.mxu0 %v412
  %v1044 = vpop.f32.mrf.mxu0
  %v1045 = vadd.f32 0.0, %v1044
  %v1046 = vpop.f32.mrf.mxu0
  %v1047 = vadd.f32 0.0, %v1046
  %1048 = vmatmul.bf16.gmra.mxu0 %v413
  %v1049 = vpop.f32.mrf.mxu0
  %v1050 = vadd.f32 0.0, %v1049
  %v1051 = vpop.f32.mrf.mxu0
  %v1052 = vadd.f32 0.0, %v1051
  %1053 = vmatmul.bf16.gmra.mxu0 %v414
  %v1054 = vpop.f32.mrf.mxu0
  %v1055 = vadd.f32 0.0, %v1054
  %v1056 = vpop.f32.mrf.mxu0
  %v1057 = vadd.f32 0.0, %v1056
  %1058 = vmatmul.bf16.gmra.mxu0 %v415
  %v1059 = vpop.f32.mrf.mxu0
  %v1060 = vadd.f32 0.0, %v1059
  %v1061 = vpop.f32.mrf.mxu0
  %v1062 = vadd.f32 0.0, %v1061
  %1063 = vmatmul.bf16.gmra.mxu0 %v416
  %v1064 = vpop.f32.mrf.mxu0
  %v1065 = vadd.f32 0.0, %v1064
  %v1066 = vpop.f32.mrf.mxu0
  %v1067 = vadd.f32 0.0, %v1066
  %1068 = vmatmul.bf16.gmra.mxu0 %v417
  %v1069 = vpop.f32.mrf.mxu0
  %v1070 = vadd.f32 0.0, %v1069
  %v1071 = vpop.f32.mrf.mxu0
  %v1072 = vadd.f32 0.0, %v1071
  %1073 = vmatmul.bf16.gmra.mxu0 %v418
  %v1074 = vpop.f32.mrf.mxu0
  %v1075 = vadd.f32 0.0, %v1074
  %v1076 = vpop.f32.mrf.mxu0
  %v1077 = vadd.f32 0.0, %v1076
  %1078 = vmatmul.bf16.gmra.mxu0 %v419
  %v1079 = vpop.f32.mrf.mxu0
  %v1080 = vadd.f32 0.0, %v1079
  %v1081 = vpop.f32.mrf.mxu0
  %v1082 = vadd.f32 0.0, %v1081
  %1083 = vmatmul.bf16.gmra.mxu0 %v420
  %v1084 = vpop.f32.mrf.mxu0
  %v1085 = vadd.f32 0.0, %v1084
  %v1086 = vpop.f32.mrf.mxu0
  %v1087 = vadd.f32 0.0, %v1086
  %1088 = vmatmul.bf16.gmra.mxu0 %v421
  %v1089 = vpop.f32.mrf.mxu0
  %v1090 = vadd.f32 0.0, %v1089
  %v1091 = vpop.f32.mrf.mxu0
  %v1092 = vadd.f32 0.0, %v1091
  %1093 = vmatmul.bf16.gmra.mxu0 %v422
  %v1094 = vpop.f32.mrf.mxu0
  %v1095 = vadd.f32 0.0, %v1094
  %v1096 = vpop.f32.mrf.mxu0
  %v1097 = vadd.f32 0.0, %v1096
  %1098 = vmatmul.bf16.gmra.mxu0 %v423
  %v1099 = vpop.f32.mrf.mxu0
  %v1100 = vadd.f32 0.0, %v1099
  %v1101 = vpop.f32.mrf.mxu0
  %v1102 = vadd.f32 0.0, %v1101
  %1103 = vmatmul.bf16.gmra.mxu0 %v424
  %v1104 = vpop.f32.mrf.mxu0
  %v1105 = vadd.f32 0.0, %v1104
  %v1106 = vpop.f32.mrf.mxu0
  %v1107 = vadd.f32 0.0, %v1106
  %1108 = vmatmul.bf16.gmra.mxu0 %v425
  %v1109 = vpop.f32.mrf.mxu0
  %v1110 = vadd.f32 0.0, %v1109
  %v1111 = vpop.f32.mrf.mxu0
  %v1112 = vadd.f32 0.0, %v1111
  %1113 = vmatmul.bf16.gmra.mxu0 %v426
  %v1114 = vpop.f32.mrf.mxu0
  %v1115 = vadd.f32 0.0, %v1114
  %v1116 = vpop.f32.mrf.mxu0
  %v1117 = vadd.f32 0.0, %v1116
  %1118 = vmatmul.bf16.gmra.mxu0 %v427
  %v1119 = vpop.f32.mrf.mxu0
  %v1120 = vadd.f32 0.0, %v1119
  %v1121 = vpop.f32.mrf.mxu0
  %v1122 = vadd.f32 0.0, %v1121
  %1123 = vdwg.mxu0
  %v1124 = vsel %vm545, %v1035, 0.0
  %1125 = vadd.xlane.f32.xlu0 %v1124
  %v1126 = vpop.xlane.xlu0 %1125
  %v1127 = vsel %vm545, %v1037, 0.0
  %1128 = vadd.xlane.f32.xlu0 %v1127
  %v1129 = vpop.xlane.xlu0 %1128
  %v1130 = vsel %vm545, %v1040, 0.0
  %1131 = vadd.xlane.f32.xlu0 %v1130
  %v1132 = vpop.xlane.xlu0 %1131
  %v1133 = vsel %vm545, %v1042, 0.0
  %1134 = vadd.xlane.f32.xlu0 %v1133
  %v1135 = vpop.xlane.xlu0 %1134
  %v1136 = vsel %vm545, %v1045, 0.0
  %1137 = vadd.xlane.f32.xlu0 %v1136
  %v1138 = vpop.xlane.xlu0 %1137
  %v1139 = vsel %vm545, %v1047, 0.0
  %1140 = vadd.xlane.f32.xlu0 %v1139
  %v1141 = vpop.xlane.xlu0 %1140
  %v1142 = vsel %vm545, %v1050, 0.0
  %1143 = vadd.xlane.f32.xlu0 %v1142
  %v1144 = vpop.xlane.xlu0 %1143
  %v1145 = vsel %vm545, %v1052, 0.0
  %1146 = vadd.xlane.f32.xlu0 %v1145
  %v1147 = vpop.xlane.xlu0 %1146
  %v1148 = vsel %vm545, %v1055, 0.0
  %1149 = vadd.xlane.f32.xlu0 %v1148
  %v1150 = vpop.xlane.xlu0 %1149
  %v1151 = vsel %vm545, %v1057, 0.0
  %1152 = vadd.xlane.f32.xlu0 %v1151
  %v1153 = vpop.xlane.xlu0 %1152
  %v1154 = vsel %vm545, %v1060, 0.0
  %1155 = vadd.xlane.f32.xlu0 %v1154
  %v1156 = vpop.xlane.xlu0 %1155
  %v1157 = vsel %vm545, %v1062, 0.0
  %1158 = vadd.xlane.f32.xlu0 %v1157
  %v1159 = vpop.xlane.xlu0 %1158
  %v1160 = vsel %vm545, %v1065, 0.0
  %1161 = vadd.xlane.f32.xlu0 %v1160
  %v1162 = vpop.xlane.xlu0 %1161
  %v1163 = vsel %vm545, %v1067, 0.0
  %1164 = vadd.xlane.f32.xlu0 %v1163
  %v1165 = vpop.xlane.xlu0 %1164
  %v1166 = vsel %vm545, %v1070, 0.0
  %1167 = vadd.xlane.f32.xlu0 %v1166
  %v1168 = vpop.xlane.xlu0 %1167
  %v1169 = vsel %vm545, %v1072, 0.0
  %1170 = vadd.xlane.f32.xlu0 %v1169
  %v1171 = vpop.xlane.xlu0 %1170
  %v1172 = vsel %vm545, %v1075, 0.0
  %1173 = vadd.xlane.f32.xlu0 %v1172
  %v1174 = vpop.xlane.xlu0 %1173
  %v1175 = vsel %vm545, %v1077, 0.0
  %1176 = vadd.xlane.f32.xlu0 %v1175
  %v1177 = vpop.xlane.xlu0 %1176
  %v1178 = vsel %vm545, %v1080, 0.0
  %1179 = vadd.xlane.f32.xlu0 %v1178
  %v1180 = vpop.xlane.xlu0 %1179
  %v1181 = vsel %vm545, %v1082, 0.0
  %1182 = vadd.xlane.f32.xlu0 %v1181
  %v1183 = vpop.xlane.xlu0 %1182
  %v1184 = vsel %vm545, %v1085, 0.0
  %1185 = vadd.xlane.f32.xlu0 %v1184
  %v1186 = vpop.xlane.xlu0 %1185
  %v1187 = vsel %vm545, %v1087, 0.0
  %1188 = vadd.xlane.f32.xlu0 %v1187
  %v1189 = vpop.xlane.xlu0 %1188
  %v1190 = vsel %vm545, %v1090, 0.0
  %1191 = vadd.xlane.f32.xlu0 %v1190
  %v1192 = vpop.xlane.xlu0 %1191
  %v1193 = vsel %vm545, %v1092, 0.0
  %1194 = vadd.xlane.f32.xlu0 %v1193
  %v1195 = vpop.xlane.xlu0 %1194
  %v1196 = vsel %vm545, %v1095, 0.0
  %1197 = vadd.xlane.f32.xlu0 %v1196
  %v1198 = vpop.xlane.xlu0 %1197
  %v1199 = vsel %vm545, %v1097, 0.0
  %1200 = vadd.xlane.f32.xlu0 %v1199
  %v1201 = vpop.xlane.xlu0 %1200
  %v1202 = vsel %vm545, %v1100, 0.0
  %1203 = vadd.xlane.f32.xlu0 %v1202
  %v1204 = vpop.xlane.xlu0 %1203
  %v1205 = vsel %vm545, %v1102, 0.0
  %1206 = vadd.xlane.f32.xlu0 %v1205
  %v1207 = vpop.xlane.xlu0 %1206
  %v1208 = vsel %vm545, %v1105, 0.0
  %1209 = vadd.xlane.f32.xlu0 %v1208
  %v1210 = vpop.xlane.xlu0 %1209
  %v1211 = vsel %vm545, %v1107, 0.0
  %1212 = vadd.xlane.f32.xlu0 %v1211
  %v1213 = vpop.xlane.xlu0 %1212
  %v1214 = vsel %vm545, %v1110, 0.0
  %1215 = vadd.xlane.f32.xlu0 %v1214
  %v1216 = vpop.xlane.xlu0 %1215
  %v1217 = vsel %vm545, %v1112, 0.0
  %1218 = vadd.xlane.f32.xlu0 %v1217
  %v1219 = vpop.xlane.xlu0 %1218
  %v1220 = vsel %vm545, %v1115, 0.0
  %1221 = vadd.xlane.f32.xlu0 %v1220
  %v1222 = vpop.xlane.xlu0 %1221
  %v1223 = vsel %vm545, %v1117, 0.0
  %1224 = vadd.xlane.f32.xlu0 %v1223
  %v1225 = vpop.xlane.xlu0 %1224
  %v1226 = vsel %vm545, %v1120, 0.0
  %1227 = vadd.xlane.f32.xlu0 %v1226
  %v1228 = vpop.xlane.xlu0 %1227
  %v1229 = vsel %vm545, %v1122, 0.0
  %1230 = vadd.xlane.f32.xlu0 %v1229
  %v1231 = vpop.xlane.xlu0 %1230
  %v1232 = vadd.f32 %v654, %v1126
  %v1233 = vadd.f32 %v655, %v1129
  %v1234 = vadd.f32 %v656, %v1132
  %v1235 = vadd.f32 %v657, %v1135
  %v1236 = vadd.f32 %v658, %v1138
  %v1237 = vadd.f32 %v659, %v1141
  %v1238 = vadd.f32 %v660, %v1144
  %v1239 = vadd.f32 %v661, %v1147
  %v1240 = vadd.f32 %v662, %v1150
  %v1241 = vadd.f32 %v663, %v1153
  %v1242 = vadd.f32 %v664, %v1156
  %v1243 = vadd.f32 %v665, %v1159
  %v1244 = vadd.f32 %v666, %v1162
  %v1245 = vadd.f32 %v667, %v1165
  %v1246 = vadd.f32 %v668, %v1168
  %v1247 = vadd.f32 %v669, %v1171
  %v1248 = vadd.f32 %v670, %v1174
  %v1249 = vadd.f32 %v671, %v1177
  %v1250 = vadd.f32 %v672, %v1180
  %v1251 = vadd.f32 %v673, %v1183
  %v1252 = vadd.f32 %v674, %v1186
  %v1253 = vadd.f32 %v675, %v1189
  %v1254 = vadd.f32 %v676, %v1192
  %v1255 = vadd.f32 %v677, %v1195
  %v1256 = vadd.f32 %v678, %v1198
  %v1257 = vadd.f32 %v679, %v1201
  %v1258 = vadd.f32 %v680, %v1204
  %v1259 = vadd.f32 %v681, %v1207
  %v1260 = vadd.f32 %v682, %v1210
  %v1261 = vadd.f32 %v683, %v1213
  %v1262 = vadd.f32 %v684, %v1216
  %v1263 = vadd.f32 %v685, %v1219
  %v1264 = vadd.f32 %v686, %v1222
  %v1265 = vadd.f32 %v687, %v1225
  %v1266 = vadd.f32 %v688, %v1228
  %v1267 = vadd.f32 %v689, %v1231
  %v1268 = vmul.f32 %v1035, %v1035
  %v1269 = vmul.f32 %v1037, %v1037
  %v1270 = vmul.f32 %v1040, %v1040
  %v1271 = vmul.f32 %v1042, %v1042
  %v1272 = vmul.f32 %v1045, %v1045
  %v1273 = vmul.f32 %v1047, %v1047
  %v1274 = vmul.f32 %v1050, %v1050
  %v1275 = vmul.f32 %v1052, %v1052
  %v1276 = vmul.f32 %v1055, %v1055
  %v1277 = vmul.f32 %v1057, %v1057
  %v1278 = vmul.f32 %v1060, %v1060
  %v1279 = vmul.f32 %v1062, %v1062
  %v1280 = vmul.f32 %v1065, %v1065
  %v1281 = vmul.f32 %v1067, %v1067
  %v1282 = vmul.f32 %v1070, %v1070
  %v1283 = vmul.f32 %v1072, %v1072
  %v1284 = vmul.f32 %v1075, %v1075
  %v1285 = vmul.f32 %v1077, %v1077
  %v1286 = vmul.f32 %v1080, %v1080
  %v1287 = vmul.f32 %v1082, %v1082
  %v1288 = vmul.f32 %v1085, %v1085
  %v1289 = vmul.f32 %v1087, %v1087
  %v1290 = vmul.f32 %v1090, %v1090
  %v1291 = vmul.f32 %v1092, %v1092
  %v1292 = vmul.f32 %v1095, %v1095
  %v1293 = vmul.f32 %v1097, %v1097
  %v1294 = vmul.f32 %v1100, %v1100
  %v1295 = vmul.f32 %v1102, %v1102
  %v1296 = vmul.f32 %v1105, %v1105
  %v1297 = vmul.f32 %v1107, %v1107
  %v1298 = vmul.f32 %v1110, %v1110
  %v1299 = vmul.f32 %v1112, %v1112
  %v1300 = vmul.f32 %v1115, %v1115
  %v1301 = vmul.f32 %v1117, %v1117
  %v1302 = vmul.f32 %v1120, %v1120
  %v1303 = vmul.f32 %v1122, %v1122
  %v1304 = vsel %vm545, %v1268, 0.0
  %1305 = vadd.xlane.f32.xlu0 %v1304
  %v1306 = vpop.xlane.xlu0 %1305
  %v1307 = vsel %vm545, %v1269, 0.0
  %1308 = vadd.xlane.f32.xlu0 %v1307
  %v1309 = vpop.xlane.xlu0 %1308
  %v1310 = vsel %vm545, %v1270, 0.0
  %1311 = vadd.xlane.f32.xlu0 %v1310
  %v1312 = vpop.xlane.xlu0 %1311
  %v1313 = vsel %vm545, %v1271, 0.0
  %1314 = vadd.xlane.f32.xlu0 %v1313
  %v1315 = vpop.xlane.xlu0 %1314
  %v1316 = vsel %vm545, %v1272, 0.0
  %1317 = vadd.xlane.f32.xlu0 %v1316
  %v1318 = vpop.xlane.xlu0 %1317
  %v1319 = vsel %vm545, %v1273, 0.0
  %1320 = vadd.xlane.f32.xlu0 %v1319
  %v1321 = vpop.xlane.xlu0 %1320
  %v1322 = vsel %vm545, %v1274, 0.0
  %1323 = vadd.xlane.f32.xlu0 %v1322
  %v1324 = vpop.xlane.xlu0 %1323
  %v1325 = vsel %vm545, %v1275, 0.0
  %1326 = vadd.xlane.f32.xlu0 %v1325
  %v1327 = vpop.xlane.xlu0 %1326
  %v1328 = vsel %vm545, %v1276, 0.0
  %1329 = vadd.xlane.f32.xlu0 %v1328
  %v1330 = vpop.xlane.xlu0 %1329
  %v1331 = vsel %vm545, %v1277, 0.0
  %1332 = vadd.xlane.f32.xlu0 %v1331
  %v1333 = vpop.xlane.xlu0 %1332
  %v1334 = vsel %vm545, %v1278, 0.0
  %1335 = vadd.xlane.f32.xlu0 %v1334
  %v1336 = vpop.xlane.xlu0 %1335
  %v1337 = vsel %vm545, %v1279, 0.0
  %1338 = vadd.xlane.f32.xlu0 %v1337
  %v1339 = vpop.xlane.xlu0 %1338
  %v1340 = vsel %vm545, %v1280, 0.0
  %1341 = vadd.xlane.f32.xlu0 %v1340
  %v1342 = vpop.xlane.xlu0 %1341
  %v1343 = vsel %vm545, %v1281, 0.0
  %1344 = vadd.xlane.f32.xlu0 %v1343
  %v1345 = vpop.xlane.xlu0 %1344
  %v1346 = vsel %vm545, %v1282, 0.0
  %1347 = vadd.xlane.f32.xlu0 %v1346
  %v1348 = vpop.xlane.xlu0 %1347
  %v1349 = vsel %vm545, %v1283, 0.0
  %1350 = vadd.xlane.f32.xlu0 %v1349
  %v1351 = vpop.xlane.xlu0 %1350
  %v1352 = vsel %vm545, %v1284, 0.0
  %1353 = vadd.xlane.f32.xlu0 %v1352
  %v1354 = vpop.xlane.xlu0 %1353
  %v1355 = vsel %vm545, %v1285, 0.0
  %1356 = vadd.xlane.f32.xlu0 %v1355
  %v1357 = vpop.xlane.xlu0 %1356
  %v1358 = vsel %vm545, %v1286, 0.0
  %1359 = vadd.xlane.f32.xlu0 %v1358
  %v1360 = vpop.xlane.xlu0 %1359
  %v1361 = vsel %vm545, %v1287, 0.0
  %1362 = vadd.xlane.f32.xlu0 %v1361
  %v1363 = vpop.xlane.xlu0 %1362
  %v1364 = vsel %vm545, %v1288, 0.0
  %1365 = vadd.xlane.f32.xlu0 %v1364
  %v1366 = vpop.xlane.xlu0 %1365
  %v1367 = vsel %vm545, %v1289, 0.0
  %1368 = vadd.xlane.f32.xlu0 %v1367
  %v1369 = vpop.xlane.xlu0 %1368
  %v1370 = vsel %vm545, %v1290, 0.0
  %1371 = vadd.xlane.f32.xlu0 %v1370
  %v1372 = vpop.xlane.xlu0 %1371
  %v1373 = vsel %vm545, %v1291, 0.0
  %1374 = vadd.xlane.f32.xlu0 %v1373
  %v1375 = vpop.xlane.xlu0 %1374
  %v1376 = vsel %vm545, %v1292, 0.0
  %1377 = vadd.xlane.f32.xlu0 %v1376
  %v1378 = vpop.xlane.xlu0 %1377
  %v1379 = vsel %vm545, %v1293, 0.0
  %1380 = vadd.xlane.f32.xlu0 %v1379
  %v1381 = vpop.xlane.xlu0 %1380
  %v1382 = vsel %vm545, %v1294, 0.0
  %1383 = vadd.xlane.f32.xlu0 %v1382
  %v1384 = vpop.xlane.xlu0 %1383
  %v1385 = vsel %vm545, %v1295, 0.0
  %1386 = vadd.xlane.f32.xlu0 %v1385
  %v1387 = vpop.xlane.xlu0 %1386
  %v1388 = vsel %vm545, %v1296, 0.0
  %1389 = vadd.xlane.f32.xlu0 %v1388
  %v1390 = vpop.xlane.xlu0 %1389
  %v1391 = vsel %vm545, %v1297, 0.0
  %1392 = vadd.xlane.f32.xlu0 %v1391
  %v1393 = vpop.xlane.xlu0 %1392
  %v1394 = vsel %vm545, %v1298, 0.0
  %1395 = vadd.xlane.f32.xlu0 %v1394
  %v1396 = vpop.xlane.xlu0 %1395
  %v1397 = vsel %vm545, %v1299, 0.0
  %1398 = vadd.xlane.f32.xlu0 %v1397
  %v1399 = vpop.xlane.xlu0 %1398
  %v1400 = vsel %vm545, %v1300, 0.0
  %1401 = vadd.xlane.f32.xlu0 %v1400
  %v1402 = vpop.xlane.xlu0 %1401
  %v1403 = vsel %vm545, %v1301, 0.0
  %1404 = vadd.xlane.f32.xlu0 %v1403
  %v1405 = vpop.xlane.xlu0 %1404
  %v1406 = vsel %vm545, %v1302, 0.0
  %1407 = vadd.xlane.f32.xlu0 %v1406
  %v1408 = vpop.xlane.xlu0 %1407
  %v1409 = vsel %vm545, %v1303, 0.0
  %1410 = vadd.xlane.f32.xlu0 %v1409
  %v1411 = vpop.xlane.xlu0 %1410
  %v1412 = vadd.f32 %v834, %v1306
  %v1413 = vadd.f32 %v835, %v1309
  %v1414 = vadd.f32 %v836, %v1312
  %v1415 = vadd.f32 %v837, %v1315
  %v1416 = vadd.f32 %v838, %v1318
  %v1417 = vadd.f32 %v839, %v1321
  %v1418 = vadd.f32 %v840, %v1324
  %v1419 = vadd.f32 %v841, %v1327
  %v1420 = vadd.f32 %v842, %v1330
  %v1421 = vadd.f32 %v843, %v1333
  %v1422 = vadd.f32 %v844, %v1336
  %v1423 = vadd.f32 %v845, %v1339
  %v1424 = vadd.f32 %v846, %v1342
  %v1425 = vadd.f32 %v847, %v1345
  %v1426 = vadd.f32 %v848, %v1348
  %v1427 = vadd.f32 %v849, %v1351
  %v1428 = vadd.f32 %v850, %v1354
  %v1429 = vadd.f32 %v851, %v1357
  %v1430 = vadd.f32 %v852, %v1360
  %v1431 = vadd.f32 %v853, %v1363
  %v1432 = vadd.f32 %v854, %v1366
  %v1433 = vadd.f32 %v855, %v1369
  %v1434 = vadd.f32 %v856, %v1372
  %v1435 = vadd.f32 %v857, %v1375
  %v1436 = vadd.f32 %v858, %v1378
  %v1437 = vadd.f32 %v859, %v1381
  %v1438 = vadd.f32 %v860, %v1384
  %v1439 = vadd.f32 %v861, %v1387
  %v1440 = vadd.f32 %v862, %v1390
  %v1441 = vadd.f32 %v863, %v1393
  %v1442 = vadd.f32 %v864, %v1396
  %v1443 = vadd.f32 %v865, %v1399
  %v1444 = vadd.f32 %v866, %v1402
  %v1445 = vadd.f32 %v867, %v1405
  %v1446 = vadd.f32 %v868, %v1408
  %v1447 = vadd.f32 %v869, %v1411
  %v1448 = vmul.f32 %v1232, 0.0078125
  %v1449 = vmul.f32 %v1233, 0.0078125
  %v1450 = vmul.f32 %v1234, 0.0078125
  %v1451 = vmul.f32 %v1235, 0.0078125
  %v1452 = vmul.f32 %v1236, 0.0078125
  %v1453 = vmul.f32 %v1237, 0.0078125
  %v1454 = vmul.f32 %v1238, 0.0078125
  %v1455 = vmul.f32 %v1239, 0.0078125
  %v1456 = vmul.f32 %v1240, 0.0078125
  %v1457 = vmul.f32 %v1241, 0.0078125
  %v1458 = vmul.f32 %v1242, 0.0078125
  %v1459 = vmul.f32 %v1243, 0.0078125
  %v1460 = vmul.f32 %v1244, 0.0078125
  %v1461 = vmul.f32 %v1245, 0.0078125
  %v1462 = vmul.f32 %v1246, 0.0078125
  %v1463 = vmul.f32 %v1247, 0.0078125
  %v1464 = vmul.f32 %v1248, 0.0078125
  %v1465 = vmul.f32 %v1249, 0.0078125
  %v1466 = vmul.f32 %v1250, 0.0078125
  %v1467 = vmul.f32 %v1251, 0.0078125
  %v1468 = vmul.f32 %v1252, 0.0078125
  %v1469 = vmul.f32 %v1253, 0.0078125
  %v1470 = vmul.f32 %v1254, 0.0078125
  %v1471 = vmul.f32 %v1255, 0.0078125
  %v1472 = vmul.f32 %v1256, 0.0078125
  %v1473 = vmul.f32 %v1257, 0.0078125
  %v1474 = vmul.f32 %v1258, 0.0078125
  %v1475 = vmul.f32 %v1259, 0.0078125
  %v1476 = vmul.f32 %v1260, 0.0078125
  %v1477 = vmul.f32 %v1261, 0.0078125
  %v1478 = vmul.f32 %v1262, 0.0078125
  %v1479 = vmul.f32 %v1263, 0.0078125
  %v1480 = vmul.f32 %v1264, 0.0078125
  %v1481 = vmul.f32 %v1265, 0.0078125
  %v1482 = vmul.f32 %v1266, 0.0078125
  %v1483 = vmul.f32 %v1267, 0.0078125
  %v1484 = vmul.f32 %v1412, 0.0078125
  %v1485 = vmul.f32 %v1413, 0.0078125
  %v1486 = vmul.f32 %v1414, 0.0078125
  %v1487 = vmul.f32 %v1415, 0.0078125
  %v1488 = vmul.f32 %v1416, 0.0078125
  %v1489 = vmul.f32 %v1417, 0.0078125
  %v1490 = vmul.f32 %v1418, 0.0078125
  %v1491 = vmul.f32 %v1419, 0.0078125
  %v1492 = vmul.f32 %v1420, 0.0078125
  %v1493 = vmul.f32 %v1421, 0.0078125
  %v1494 = vmul.f32 %v1422, 0.0078125
  %v1495 = vmul.f32 %v1423, 0.0078125
  %v1496 = vmul.f32 %v1424, 0.0078125
  %v1497 = vmul.f32 %v1425, 0.0078125
  %v1498 = vmul.f32 %v1426, 0.0078125
  %v1499 = vmul.f32 %v1427, 0.0078125
  %v1500 = vmul.f32 %v1428, 0.0078125
  %v1501 = vmul.f32 %v1429, 0.0078125
  %v1502 = vmul.f32 %v1430, 0.0078125
  %v1503 = vmul.f32 %v1431, 0.0078125
  %v1504 = vmul.f32 %v1432, 0.0078125
  %v1505 = vmul.f32 %v1433, 0.0078125
  %v1506 = vmul.f32 %v1434, 0.0078125
  %v1507 = vmul.f32 %v1435, 0.0078125
  %v1508 = vmul.f32 %v1436, 0.0078125
  %v1509 = vmul.f32 %v1437, 0.0078125
  %v1510 = vmul.f32 %v1438, 0.0078125
  %v1511 = vmul.f32 %v1439, 0.0078125
  %v1512 = vmul.f32 %v1440, 0.0078125
  %v1513 = vmul.f32 %v1441, 0.0078125
  %v1514 = vmul.f32 %v1442, 0.0078125
  %v1515 = vmul.f32 %v1443, 0.0078125
  %v1516 = vmul.f32 %v1444, 0.0078125
  %v1517 = vmul.f32 %v1445, 0.0078125
  %v1518 = vmul.f32 %v1446, 0.0078125
  %v1519 = vmul.f32 %v1447, 0.0078125
  %v1520 = vmul.f32 %v1448, %v1448
  %v1521 = vmul.f32 %v1449, %v1449
  %v1522 = vmul.f32 %v1450, %v1450
  %v1523 = vmul.f32 %v1451, %v1451
  %v1524 = vmul.f32 %v1452, %v1452
  %v1525 = vmul.f32 %v1453, %v1453
  %v1526 = vmul.f32 %v1454, %v1454
  %v1527 = vmul.f32 %v1455, %v1455
  %v1528 = vmul.f32 %v1456, %v1456
  %v1529 = vmul.f32 %v1457, %v1457
  %v1530 = vmul.f32 %v1458, %v1458
  %v1531 = vmul.f32 %v1459, %v1459
  %v1532 = vmul.f32 %v1460, %v1460
  %v1533 = vmul.f32 %v1461, %v1461
  %v1534 = vmul.f32 %v1462, %v1462
  %v1535 = vmul.f32 %v1463, %v1463
  %v1536 = vmul.f32 %v1464, %v1464
  %v1537 = vmul.f32 %v1465, %v1465
  %v1538 = vmul.f32 %v1466, %v1466
  %v1539 = vmul.f32 %v1467, %v1467
  %v1540 = vmul.f32 %v1468, %v1468
  %v1541 = vmul.f32 %v1469, %v1469
  %v1542 = vmul.f32 %v1470, %v1470
  %v1543 = vmul.f32 %v1471, %v1471
  %v1544 = vmul.f32 %v1472, %v1472
  %v1545 = vmul.f32 %v1473, %v1473
  %v1546 = vmul.f32 %v1474, %v1474
  %v1547 = vmul.f32 %v1475, %v1475
  %v1548 = vmul.f32 %v1476, %v1476
  %v1549 = vmul.f32 %v1477, %v1477
  %v1550 = vmul.f32 %v1478, %v1478
  %v1551 = vmul.f32 %v1479, %v1479
  %v1552 = vmul.f32 %v1480, %v1480
  %v1553 = vmul.f32 %v1481, %v1481
  %v1554 = vmul.f32 %v1482, %v1482
  %v1555 = vmul.f32 %v1483, %v1483
  %v1556 = vsub.f32 %v1484, %v1520
  %v1557 = vsub.f32 %v1485, %v1521
  %v1558 = vsub.f32 %v1486, %v1522
  %v1559 = vsub.f32 %v1487, %v1523
  %v1560 = vsub.f32 %v1488, %v1524
  %v1561 = vsub.f32 %v1489, %v1525
  %v1562 = vsub.f32 %v1490, %v1526
  %v1563 = vsub.f32 %v1491, %v1527
  %v1564 = vsub.f32 %v1492, %v1528
  %v1565 = vsub.f32 %v1493, %v1529
  %v1566 = vsub.f32 %v1494, %v1530
  %v1567 = vsub.f32 %v1495, %v1531
  %v1568 = vsub.f32 %v1496, %v1532
  %v1569 = vsub.f32 %v1497, %v1533
  %v1570 = vsub.f32 %v1498, %v1534
  %v1571 = vsub.f32 %v1499, %v1535
  %v1572 = vsub.f32 %v1500, %v1536
  %v1573 = vsub.f32 %v1501, %v1537
  %v1574 = vsub.f32 %v1502, %v1538
  %v1575 = vsub.f32 %v1503, %v1539
  %v1576 = vsub.f32 %v1504, %v1540
  %v1577 = vsub.f32 %v1505, %v1541
  %v1578 = vsub.f32 %v1506, %v1542
  %v1579 = vsub.f32 %v1507, %v1543
  %v1580 = vsub.f32 %v1508, %v1544
  %v1581 = vsub.f32 %v1509, %v1545
  %v1582 = vsub.f32 %v1510, %v1546
  %v1583 = vsub.f32 %v1511, %v1547
  %v1584 = vsub.f32 %v1512, %v1548
  %v1585 = vsub.f32 %v1513, %v1549
  %v1586 = vsub.f32 %v1514, %v1550
  %v1587 = vsub.f32 %v1515, %v1551
  %v1588 = vsub.f32 %v1516, %v1552
  %v1589 = vsub.f32 %v1517, %v1553
  %v1590 = vsub.f32 %v1518, %v1554
  %v1591 = vsub.f32 %v1519, %v1555
  %v1592 = vadd.f32 %v1556, 1e-05
  %v1593 = vadd.f32 %v1557, 1e-05
  %v1594 = vadd.f32 %v1558, 1e-05
  %v1595 = vadd.f32 %v1559, 1e-05
  %v1596 = vadd.f32 %v1560, 1e-05
  %v1597 = vadd.f32 %v1561, 1e-05
  %v1598 = vadd.f32 %v1562, 1e-05
  %v1599 = vadd.f32 %v1563, 1e-05
  %v1600 = vadd.f32 %v1564, 1e-05
  %v1601 = vadd.f32 %v1565, 1e-05
  %v1602 = vadd.f32 %v1566, 1e-05
  %v1603 = vadd.f32 %v1567, 1e-05
  %v1604 = vadd.f32 %v1568, 1e-05
  %v1605 = vadd.f32 %v1569, 1e-05
  %v1606 = vadd.f32 %v1570, 1e-05
  %v1607 = vadd.f32 %v1571, 1e-05
  %v1608 = vadd.f32 %v1572, 1e-05
  %v1609 = vadd.f32 %v1573, 1e-05
  %v1610 = vadd.f32 %v1574, 1e-05
  %v1611 = vadd.f32 %v1575, 1e-05
  %v1612 = vadd.f32 %v1576, 1e-05
  %v1613 = vadd.f32 %v1577, 1e-05
  %v1614 = vadd.f32 %v1578, 1e-05
  %v1615 = vadd.f32 %v1579, 1e-05
  %v1616 = vadd.f32 %v1580, 1e-05
  %v1617 = vadd.f32 %v1581, 1e-05
  %v1618 = vadd.f32 %v1582, 1e-05
  %v1619 = vadd.f32 %v1583, 1e-05
  %v1620 = vadd.f32 %v1584, 1e-05
  %v1621 = vadd.f32 %v1585, 1e-05
  %v1622 = vadd.f32 %v1586, 1e-05
  %v1623 = vadd.f32 %v1587, 1e-05
  %v1624 = vadd.f32 %v1588, 1e-05
  %v1625 = vadd.f32 %v1589, 1e-05
  %v1626 = vadd.f32 %v1590, 1e-05
  %v1627 = vadd.f32 %v1591, 1e-05
  %v1628 = vrsqrt.pop %v1592
  %v1629 = vmul.f32 %v1628, %v1592
  %v1630 = vmul.f32 %v1629, %v1628
  %v1631 = vmul.f32 0.5, %v1630
  %v1632 = vsub.f32 1.5, %v1631
  %v1633 = vmul.f32 %v1628, %v1632
  %vm1634 = vweird.f32 %v1592
  %vm1635 = vweird.f32 %v1628
  %vm1636 = vmor %vm1634, %vm1635
  %v1637 = vsel %vm1636, %v1628, %v1633
  %v1638 = vrsqrt.pop %v1593
  %v1639 = vmul.f32 %v1638, %v1593
  %v1640 = vmul.f32 %v1639, %v1638
  %v1641 = vmul.f32 0.5, %v1640
  %v1642 = vsub.f32 1.5, %v1641
  %v1643 = vmul.f32 %v1638, %v1642
  %vm1644 = vweird.f32 %v1593
  %vm1645 = vweird.f32 %v1638
  %vm1646 = vmor %vm1644, %vm1645
  %v1647 = vsel %vm1646, %v1638, %v1643
  %v1648 = vrsqrt.pop %v1594
  %v1649 = vmul.f32 %v1648, %v1594
  %v1650 = vmul.f32 %v1649, %v1648
  %v1651 = vmul.f32 0.5, %v1650
  %v1652 = vsub.f32 1.5, %v1651
  %v1653 = vmul.f32 %v1648, %v1652
  %vm1654 = vweird.f32 %v1594
  %vm1655 = vweird.f32 %v1648
  %vm1656 = vmor %vm1654, %vm1655
  %v1657 = vsel %vm1656, %v1648, %v1653
  %v1658 = vrsqrt.pop %v1595
  %v1659 = vmul.f32 %v1658, %v1595
  %v1660 = vmul.f32 %v1659, %v1658
  %v1661 = vmul.f32 0.5, %v1660
  %v1662 = vsub.f32 1.5, %v1661
  %v1663 = vmul.f32 %v1658, %v1662
  %vm1664 = vweird.f32 %v1595
  %vm1665 = vweird.f32 %v1658
  %vm1666 = vmor %vm1664, %vm1665
  %v1667 = vsel %vm1666, %v1658, %v1663
  %v1668 = vrsqrt.pop %v1596
  %v1669 = vmul.f32 %v1668, %v1596
  %v1670 = vmul.f32 %v1669, %v1668
  %v1671 = vmul.f32 0.5, %v1670
  %v1672 = vsub.f32 1.5, %v1671
  %v1673 = vmul.f32 %v1668, %v1672
  %vm1674 = vweird.f32 %v1596
  %vm1675 = vweird.f32 %v1668
  %vm1676 = vmor %vm1674, %vm1675
  %v1677 = vsel %vm1676, %v1668, %v1673
  %v1678 = vrsqrt.pop %v1597
  %v1679 = vmul.f32 %v1678, %v1597
  %v1680 = vmul.f32 %v1679, %v1678
  %v1681 = vmul.f32 0.5, %v1680
  %v1682 = vsub.f32 1.5, %v1681
  %v1683 = vmul.f32 %v1678, %v1682
  %vm1684 = vweird.f32 %v1597
  %vm1685 = vweird.f32 %v1678
  %vm1686 = vmor %vm1684, %vm1685
  %v1687 = vsel %vm1686, %v1678, %v1683
  %v1688 = vrsqrt.pop %v1598
  %v1689 = vmul.f32 %v1688, %v1598
  %v1690 = vmul.f32 %v1689, %v1688
  %v1691 = vmul.f32 0.5, %v1690
  %v1692 = vsub.f32 1.5, %v1691
  %v1693 = vmul.f32 %v1688, %v1692
  %vm1694 = vweird.f32 %v1598
  %vm1695 = vweird.f32 %v1688
  %vm1696 = vmor %vm1694, %vm1695
  %v1697 = vsel %vm1696, %v1688, %v1693
  %v1698 = vrsqrt.pop %v1599
  %v1699 = vmul.f32 %v1698, %v1599
  %v1700 = vmul.f32 %v1699, %v1698
  %v1701 = vmul.f32 0.5, %v1700
  %v1702 = vsub.f32 1.5, %v1701
  %v1703 = vmul.f32 %v1698, %v1702
  %vm1704 = vweird.f32 %v1599
  %vm1705 = vweird.f32 %v1698
  %vm1706 = vmor %vm1704, %vm1705
  %v1707 = vsel %vm1706, %v1698, %v1703
  %v1708 = vrsqrt.pop %v1600
  %v1709 = vmul.f32 %v1708, %v1600
  %v1710 = vmul.f32 %v1709, %v1708
  %v1711 = vmul.f32 0.5, %v1710
  %v1712 = vsub.f32 1.5, %v1711
  %v1713 = vmul.f32 %v1708, %v1712
  %vm1714 = vweird.f32 %v1600
  %vm1715 = vweird.f32 %v1708
  %vm1716 = vmor %vm1714, %vm1715
  %v1717 = vsel %vm1716, %v1708, %v1713
  %v1718 = vrsqrt.pop %v1601
  %v1719 = vmul.f32 %v1718, %v1601
  %v1720 = vmul.f32 %v1719, %v1718
  %v1721 = vmul.f32 0.5, %v1720
  %v1722 = vsub.f32 1.5, %v1721
  %v1723 = vmul.f32 %v1718, %v1722
  %vm1724 = vweird.f32 %v1601
  %vm1725 = vweird.f32 %v1718
  %vm1726 = vmor %vm1724, %vm1725
  %v1727 = vsel %vm1726, %v1718, %v1723
  %v1728 = vrsqrt.pop %v1602
  %v1729 = vmul.f32 %v1728, %v1602
  %v1730 = vmul.f32 %v1729, %v1728
  %v1731 = vmul.f32 0.5, %v1730
  %v1732 = vsub.f32 1.5, %v1731
  %v1733 = vmul.f32 %v1728, %v1732
  %vm1734 = vweird.f32 %v1602
  %vm1735 = vweird.f32 %v1728
  %vm1736 = vmor %vm1734, %vm1735
  %v1737 = vsel %vm1736, %v1728, %v1733
  %v1738 = vrsqrt.pop %v1603
  %v1739 = vmul.f32 %v1738, %v1603
  %v1740 = vmul.f32 %v1739, %v1738
  %v1741 = vmul.f32 0.5, %v1740
  %v1742 = vsub.f32 1.5, %v1741
  %v1743 = vmul.f32 %v1738, %v1742
  %vm1744 = vweird.f32 %v1603
  %vm1745 = vweird.f32 %v1738
  %vm1746 = vmor %vm1744, %vm1745
  %v1747 = vsel %vm1746, %v1738, %v1743
  %v1748 = vrsqrt.pop %v1604
  %v1749 = vmul.f32 %v1748, %v1604
  %v1750 = vmul.f32 %v1749, %v1748
  %v1751 = vmul.f32 0.5, %v1750
  %v1752 = vsub.f32 1.5, %v1751
  %v1753 = vmul.f32 %v1748, %v1752
  %vm1754 = vweird.f32 %v1604
  %vm1755 = vweird.f32 %v1748
  %vm1756 = vmor %vm1754, %vm1755
  %v1757 = vsel %vm1756, %v1748, %v1753
  %v1758 = vrsqrt.pop %v1605
  %v1759 = vmul.f32 %v1758, %v1605
  %v1760 = vmul.f32 %v1759, %v1758
  %v1761 = vmul.f32 0.5, %v1760
  %v1762 = vsub.f32 1.5, %v1761
  %v1763 = vmul.f32 %v1758, %v1762
  %vm1764 = vweird.f32 %v1605
  %vm1765 = vweird.f32 %v1758
  %vm1766 = vmor %vm1764, %vm1765
  %v1767 = vsel %vm1766, %v1758, %v1763
  %v1768 = vrsqrt.pop %v1606
  %v1769 = vmul.f32 %v1768, %v1606
  %v1770 = vmul.f32 %v1769, %v1768
  %v1771 = vmul.f32 0.5, %v1770
  %v1772 = vsub.f32 1.5, %v1771
  %v1773 = vmul.f32 %v1768, %v1772
  %vm1774 = vweird.f32 %v1606
  %vm1775 = vweird.f32 %v1768
  %vm1776 = vmor %vm1774, %vm1775
  %v1777 = vsel %vm1776, %v1768, %v1773
  %v1778 = vrsqrt.pop %v1607
  %v1779 = vmul.f32 %v1778, %v1607
  %v1780 = vmul.f32 %v1779, %v1778
  %v1781 = vmul.f32 0.5, %v1780
  %v1782 = vsub.f32 1.5, %v1781
  %v1783 = vmul.f32 %v1778, %v1782
  %vm1784 = vweird.f32 %v1607
  %vm1785 = vweird.f32 %v1778
  %vm1786 = vmor %vm1784, %vm1785
  %v1787 = vsel %vm1786, %v1778, %v1783
  %v1788 = vrsqrt.pop %v1608
  %v1789 = vmul.f32 %v1788, %v1608
  %v1790 = vmul.f32 %v1789, %v1788
  %v1791 = vmul.f32 0.5, %v1790
  %v1792 = vsub.f32 1.5, %v1791
  %v1793 = vmul.f32 %v1788, %v1792
  %vm1794 = vweird.f32 %v1608
  %vm1795 = vweird.f32 %v1788
  %vm1796 = vmor %vm1794, %vm1795
  %v1797 = vsel %vm1796, %v1788, %v1793
  %v1798 = vrsqrt.pop %v1609
  %v1799 = vmul.f32 %v1798, %v1609
  %v1800 = vmul.f32 %v1799, %v1798
  %v1801 = vmul.f32 0.5, %v1800
  %v1802 = vsub.f32 1.5, %v1801
  %v1803 = vmul.f32 %v1798, %v1802
  %vm1804 = vweird.f32 %v1609
  %vm1805 = vweird.f32 %v1798
  %vm1806 = vmor %vm1804, %vm1805
  %v1807 = vsel %vm1806, %v1798, %v1803
  %v1808 = vrsqrt.pop %v1610
  %v1809 = vmul.f32 %v1808, %v1610
  %v1810 = vmul.f32 %v1809, %v1808
  %v1811 = vmul.f32 0.5, %v1810
  %v1812 = vsub.f32 1.5, %v1811
  %v1813 = vmul.f32 %v1808, %v1812
  %vm1814 = vweird.f32 %v1610
  %vm1815 = vweird.f32 %v1808
  %vm1816 = vmor %vm1814, %vm1815
  %v1817 = vsel %vm1816, %v1808, %v1813
  %v1818 = vrsqrt.pop %v1611
  %v1819 = vmul.f32 %v1818, %v1611
  %v1820 = vmul.f32 %v1819, %v1818
  %v1821 = vmul.f32 0.5, %v1820
  %v1822 = vsub.f32 1.5, %v1821
  %v1823 = vmul.f32 %v1818, %v1822
  %vm1824 = vweird.f32 %v1611
  %vm1825 = vweird.f32 %v1818
  %vm1826 = vmor %vm1824, %vm1825
  %v1827 = vsel %vm1826, %v1818, %v1823
  %v1828 = vrsqrt.pop %v1612
  %v1829 = vmul.f32 %v1828, %v1612
  %v1830 = vmul.f32 %v1829, %v1828
  %v1831 = vmul.f32 0.5, %v1830
  %v1832 = vsub.f32 1.5, %v1831
  %v1833 = vmul.f32 %v1828, %v1832
  %vm1834 = vweird.f32 %v1612
  %vm1835 = vweird.f32 %v1828
  %vm1836 = vmor %vm1834, %vm1835
  %v1837 = vsel %vm1836, %v1828, %v1833
  %v1838 = vrsqrt.pop %v1613
  %v1839 = vmul.f32 %v1838, %v1613
  %v1840 = vmul.f32 %v1839, %v1838
  %v1841 = vmul.f32 0.5, %v1840
  %v1842 = vsub.f32 1.5, %v1841
  %v1843 = vmul.f32 %v1838, %v1842
  %vm1844 = vweird.f32 %v1613
  %vm1845 = vweird.f32 %v1838
  %vm1846 = vmor %vm1844, %vm1845
  %v1847 = vsel %vm1846, %v1838, %v1843
  %v1848 = vrsqrt.pop %v1614
  %v1849 = vmul.f32 %v1848, %v1614
  %v1850 = vmul.f32 %v1849, %v1848
  %v1851 = vmul.f32 0.5, %v1850
  %v1852 = vsub.f32 1.5, %v1851
  %v1853 = vmul.f32 %v1848, %v1852
  %vm1854 = vweird.f32 %v1614
  %vm1855 = vweird.f32 %v1848
  %vm1856 = vmor %vm1854, %vm1855
  %v1857 = vsel %vm1856, %v1848, %v1853
  %v1858 = vrsqrt.pop %v1615
  %v1859 = vmul.f32 %v1858, %v1615
  %v1860 = vmul.f32 %v1859, %v1858
  %v1861 = vmul.f32 0.5, %v1860
  %v1862 = vsub.f32 1.5, %v1861
  %v1863 = vmul.f32 %v1858, %v1862
  %vm1864 = vweird.f32 %v1615
  %vm1865 = vweird.f32 %v1858
  %vm1866 = vmor %vm1864, %vm1865
  %v1867 = vsel %vm1866, %v1858, %v1863
  %v1868 = vrsqrt.pop %v1616
  %v1869 = vmul.f32 %v1868, %v1616
  %v1870 = vmul.f32 %v1869, %v1868
  %v1871 = vmul.f32 0.5, %v1870
  %v1872 = vsub.f32 1.5, %v1871
  %v1873 = vmul.f32 %v1868, %v1872
  %vm1874 = vweird.f32 %v1616
  %vm1875 = vweird.f32 %v1868
  %vm1876 = vmor %vm1874, %vm1875
  %v1877 = vsel %vm1876, %v1868, %v1873
  %v1878 = vrsqrt.pop %v1617
  %v1879 = vmul.f32 %v1878, %v1617
  %v1880 = vmul.f32 %v1879, %v1878
  %v1881 = vmul.f32 0.5, %v1880
  %v1882 = vsub.f32 1.5, %v1881
  %v1883 = vmul.f32 %v1878, %v1882
  %vm1884 = vweird.f32 %v1617
  %vm1885 = vweird.f32 %v1878
  %vm1886 = vmor %vm1884, %vm1885
  %v1887 = vsel %vm1886, %v1878, %v1883
  %v1888 = vrsqrt.pop %v1618
  %v1889 = vmul.f32 %v1888, %v1618
  %v1890 = vmul.f32 %v1889, %v1888
  %v1891 = vmul.f32 0.5, %v1890
  %v1892 = vsub.f32 1.5, %v1891
  %v1893 = vmul.f32 %v1888, %v1892
  %vm1894 = vweird.f32 %v1618
  %vm1895 = vweird.f32 %v1888
  %vm1896 = vmor %vm1894, %vm1895
  %v1897 = vsel %vm1896, %v1888, %v1893
  %v1898 = vrsqrt.pop %v1619
  %v1899 = vmul.f32 %v1898, %v1619
  %v1900 = vmul.f32 %v1899, %v1898
  %v1901 = vmul.f32 0.5, %v1900
  %v1902 = vsub.f32 1.5, %v1901
  %v1903 = vmul.f32 %v1898, %v1902
  %vm1904 = vweird.f32 %v1619
  %vm1905 = vweird.f32 %v1898
  %vm1906 = vmor %vm1904, %vm1905
  %v1907 = vsel %vm1906, %v1898, %v1903
  %v1908 = vrsqrt.pop %v1620
  %v1909 = vmul.f32 %v1908, %v1620
  %v1910 = vmul.f32 %v1909, %v1908
  %v1911 = vmul.f32 0.5, %v1910
  %v1912 = vsub.f32 1.5, %v1911
  %v1913 = vmul.f32 %v1908, %v1912
  %vm1914 = vweird.f32 %v1620
  %vm1915 = vweird.f32 %v1908
  %vm1916 = vmor %vm1914, %vm1915
  %v1917 = vsel %vm1916, %v1908, %v1913
  %v1918 = vrsqrt.pop %v1621
  %v1919 = vmul.f32 %v1918, %v1621
  %v1920 = vmul.f32 %v1919, %v1918
  %v1921 = vmul.f32 0.5, %v1920
  %v1922 = vsub.f32 1.5, %v1921
  %v1923 = vmul.f32 %v1918, %v1922
  %vm1924 = vweird.f32 %v1621
  %vm1925 = vweird.f32 %v1918
  %vm1926 = vmor %vm1924, %vm1925
  %v1927 = vsel %vm1926, %v1918, %v1923
  %v1928 = vrsqrt.pop %v1622
  %v1929 = vmul.f32 %v1928, %v1622
  %v1930 = vmul.f32 %v1929, %v1928
  %v1931 = vmul.f32 0.5, %v1930
  %v1932 = vsub.f32 1.5, %v1931
  %v1933 = vmul.f32 %v1928, %v1932
  %vm1934 = vweird.f32 %v1622
  %vm1935 = vweird.f32 %v1928
  %vm1936 = vmor %vm1934, %vm1935
  %v1937 = vsel %vm1936, %v1928, %v1933
  %v1938 = vrsqrt.pop %v1623
  %v1939 = vmul.f32 %v1938, %v1623
  %v1940 = vmul.f32 %v1939, %v1938
  %v1941 = vmul.f32 0.5, %v1940
  %v1942 = vsub.f32 1.5, %v1941
  %v1943 = vmul.f32 %v1938, %v1942
  %vm1944 = vweird.f32 %v1623
  %vm1945 = vweird.f32 %v1938
  %vm1946 = vmor %vm1944, %vm1945
  %v1947 = vsel %vm1946, %v1938, %v1943
  %v1948 = vrsqrt.pop %v1624
  %v1949 = vmul.f32 %v1948, %v1624
  %v1950 = vmul.f32 %v1949, %v1948
  %v1951 = vmul.f32 0.5, %v1950
  %v1952 = vsub.f32 1.5, %v1951
  %v1953 = vmul.f32 %v1948, %v1952
  %vm1954 = vweird.f32 %v1624
  %vm1955 = vweird.f32 %v1948
  %vm1956 = vmor %vm1954, %vm1955
  %v1957 = vsel %vm1956, %v1948, %v1953
  %v1958 = vrsqrt.pop %v1625
  %v1959 = vmul.f32 %v1958, %v1625
  %v1960 = vmul.f32 %v1959, %v1958
  %v1961 = vmul.f32 0.5, %v1960
  %v1962 = vsub.f32 1.5, %v1961
  %v1963 = vmul.f32 %v1958, %v1962
  %vm1964 = vweird.f32 %v1625
  %vm1965 = vweird.f32 %v1958
  %vm1966 = vmor %vm1964, %vm1965
  %v1967 = vsel %vm1966, %v1958, %v1963
  %v1968 = vrsqrt.pop %v1626
  %v1969 = vmul.f32 %v1968, %v1626
  %v1970 = vmul.f32 %v1969, %v1968
  %v1971 = vmul.f32 0.5, %v1970
  %v1972 = vsub.f32 1.5, %v1971
  %v1973 = vmul.f32 %v1968, %v1972
  %vm1974 = vweird.f32 %v1626
  %vm1975 = vweird.f32 %v1968
  %vm1976 = vmor %vm1974, %vm1975
  %v1977 = vsel %vm1976, %v1968, %v1973
  %v1978 = vrsqrt.pop %v1627
  %v1979 = vmul.f32 %v1978, %v1627
  %v1980 = vmul.f32 %v1979, %v1978
  %v1981 = vmul.f32 0.5, %v1980
  %v1982 = vsub.f32 1.5, %v1981
  %v1983 = vmul.f32 %v1978, %v1982
  %vm1984 = vweird.f32 %v1627
  %vm1985 = vweird.f32 %v1978
  %vm1986 = vmor %vm1984, %vm1985
  %v1987 = vsel %vm1986, %v1978, %v1983
  %v1988 = vld [vmem:[%s3] sm:$0xff]
  %v1989 = vld [vmem:[%s3 + $0x8] sm:$0xff]
  %v1990 = vld [vmem:[%s3 + $0x10] sm:$0xff]
  %v1991 = vld [vmem:[%s3 + $0x18] sm:$0xff]
  %v1992 = vld [vmem:[%s3 + $0x20] sm:$0xff]
  %v1993 = vld [vmem:[%s3 + $0x28] sm:$0xff]
  %v1994 = vld [vmem:[%s3 + $0x30] sm:$0xff]
  %v1995 = vld [vmem:[%s3 + $0x38] sm:$0xff]
  %v1996 = vld [vmem:[%s3 + $0x40] sm:$0xff]
  %v1997 = vld [vmem:[%s3 + $0x48] sm:$0xff]
  %v1998 = vld [vmem:[%s3 + $0x50] sm:$0xff]
  %v1999 = vld [vmem:[%s3 + $0x58] sm:$0xff]
  %v2000 = vld [vmem:[%s3 + $0x60] sm:$0xff]
  %v2001 = vld [vmem:[%s3 + $0x68] sm:$0xff]
  %v2002 = vld [vmem:[%s3 + $0x70] sm:$0xff]
  %v2003 = vld [vmem:[%s3 + $0x78] sm:$0xff]
  %v2004 = vld [vmem:[%s3 + $0x80] sm:$0xff]
  %v2005 = vld [vmem:[%s3 + $0x88] sm:$0xff]
  %v2006 = vld [vmem:[%s3 + $0x90] sm:$0xff]
  %v2007 = vld [vmem:[%s3 + $0x98] sm:$0xff]
  %v2008 = vld [vmem:[%s3 + $0xa0] sm:$0xff]
  %v2009 = vld [vmem:[%s3 + $0xa8] sm:$0xff]
  %v2010 = vld [vmem:[%s3 + $0xb0] sm:$0xff]
  %v2011 = vld [vmem:[%s3 + $0xb8] sm:$0xff]
  %v2012 = vld [vmem:[%s3 + $0xc0] sm:$0xff]
  %v2013 = vld [vmem:[%s3 + $0xc8] sm:$0xff]
  %v2014 = vld [vmem:[%s3 + $0xd0] sm:$0xff]
  %v2015 = vld [vmem:[%s3 + $0xd8] sm:$0xff]
  %v2016 = vld [vmem:[%s3 + $0xe0] sm:$0xff]
  %v2017 = vld [vmem:[%s3 + $0xe8] sm:$0xff]
  %v2018 = vld [vmem:[%s3 + $0xf0] sm:$0xff]
  %v2019 = vld [vmem:[%s3 + $0xf8] sm:$0xff]
  %v2020 = vld [vmem:[%s3 + $0x100] sm:$0xff]
  %v2021 = vld [vmem:[%s3 + $0x108] sm:$0xff]
  %v2022 = vld [vmem:[%s3 + $0x110] sm:$0xff]
  %v2023 = vld [vmem:[%s3 + $0x118] sm:$0xff]
  %v2024 = vmul.f32 %v1988, %v1637
  %v2025 = vmul.f32 %v1989, %v1647
  %v2026 = vmul.f32 %v1990, %v1657
  %v2027 = vmul.f32 %v1991, %v1667
  %v2028 = vmul.f32 %v1992, %v1677
  %v2029 = vmul.f32 %v1993, %v1687
  %v2030 = vmul.f32 %v1994, %v1697
  %v2031 = vmul.f32 %v1995, %v1707
  %v2032 = vmul.f32 %v1996, %v1717
  %v2033 = vmul.f32 %v1997, %v1727
  %v2034 = vmul.f32 %v1998, %v1737
  %v2035 = vmul.f32 %v1999, %v1747
  %v2036 = vmul.f32 %v2000, %v1757
  %v2037 = vmul.f32 %v2001, %v1767
  %v2038 = vmul.f32 %v2002, %v1777
  %v2039 = vmul.f32 %v2003, %v1787
  %v2040 = vmul.f32 %v2004, %v1797
  %v2041 = vmul.f32 %v2005, %v1807
  %v2042 = vmul.f32 %v2006, %v1817
  %v2043 = vmul.f32 %v2007, %v1827
  %v2044 = vmul.f32 %v2008, %v1837
  %v2045 = vmul.f32 %v2009, %v1847
  %v2046 = vmul.f32 %v2010, %v1857
  %v2047 = vmul.f32 %v2011, %v1867
  %v2048 = vmul.f32 %v2012, %v1877
  %v2049 = vmul.f32 %v2013, %v1887
  %v2050 = vmul.f32 %v2014, %v1897
  %v2051 = vmul.f32 %v2015, %v1907
  %v2052 = vmul.f32 %v2016, %v1917
  %v2053 = vmul.f32 %v2017, %v1927
  %v2054 = vmul.f32 %v2018, %v1937
  %v2055 = vmul.f32 %v2019, %v1947
  %v2056 = vmul.f32 %v2020, %v1957
  %v2057 = vmul.f32 %v2021, %v1967
  %v2058 = vmul.f32 %v2022, %v1977
  %v2059 = vmul.f32 %v2023, %v1987
  %v2060 = vld [vmem:[%s4] sm:$0xff]
  %v2061 = vld [vmem:[%s4 + $0x8] sm:$0xff]
  %v2062 = vld [vmem:[%s4 + $0x10] sm:$0xff]
  %v2063 = vld [vmem:[%s4 + $0x18] sm:$0xff]
  %v2064 = vld [vmem:[%s4 + $0x20] sm:$0xff]
  %v2065 = vld [vmem:[%s4 + $0x28] sm:$0xff]
  %v2066 = vld [vmem:[%s4 + $0x30] sm:$0xff]
  %v2067 = vld [vmem:[%s4 + $0x38] sm:$0xff]
  %v2068 = vld [vmem:[%s4 + $0x40] sm:$0xff]
  %v2069 = vld [vmem:[%s4 + $0x48] sm:$0xff]
  %v2070 = vld [vmem:[%s4 + $0x50] sm:$0xff]
  %v2071 = vld [vmem:[%s4 + $0x58] sm:$0xff]
  %v2072 = vld [vmem:[%s4 + $0x60] sm:$0xff]
  %v2073 = vld [vmem:[%s4 + $0x68] sm:$0xff]
  %v2074 = vld [vmem:[%s4 + $0x70] sm:$0xff]
  %v2075 = vld [vmem:[%s4 + $0x78] sm:$0xff]
  %v2076 = vld [vmem:[%s4 + $0x80] sm:$0xff]
  %v2077 = vld [vmem:[%s4 + $0x88] sm:$0xff]
  %v2078 = vld [vmem:[%s4 + $0x90] sm:$0xff]
  %v2079 = vld [vmem:[%s4 + $0x98] sm:$0xff]
  %v2080 = vld [vmem:[%s4 + $0xa0] sm:$0xff]
  %v2081 = vld [vmem:[%s4 + $0xa8] sm:$0xff]
  %v2082 = vld [vmem:[%s4 + $0xb0] sm:$0xff]
  %v2083 = vld [vmem:[%s4 + $0xb8] sm:$0xff]
  %v2084 = vld [vmem:[%s4 + $0xc0] sm:$0xff]
  %v2085 = vld [vmem:[%s4 + $0xc8] sm:$0xff]
  %v2086 = vld [vmem:[%s4 + $0xd0] sm:$0xff]
  %v2087 = vld [vmem:[%s4 + $0xd8] sm:$0xff]
  %v2088 = vld [vmem:[%s4 + $0xe0] sm:$0xff]
  %v2089 = vld [vmem:[%s4 + $0xe8] sm:$0xff]
  %v2090 = vld [vmem:[%s4 + $0xf0] sm:$0xff]
  %v2091 = vld [vmem:[%s4 + $0xf8] sm:$0xff]
  %v2092 = vld [vmem:[%s4 + $0x100] sm:$0xff]
  %v2093 = vld [vmem:[%s4 + $0x108] sm:$0xff]
  %v2094 = vld [vmem:[%s4 + $0x110] sm:$0xff]
  %v2095 = vld [vmem:[%s4 + $0x118] sm:$0xff]
  %v2096 = vmul.f32 %v1448, %v2024
  %v2097 = vmul.f32 %v1449, %v2025
  %v2098 = vmul.f32 %v1450, %v2026
  %v2099 = vmul.f32 %v1451, %v2027
  %v2100 = vmul.f32 %v1452, %v2028
  %v2101 = vmul.f32 %v1453, %v2029
  %v2102 = vmul.f32 %v1454, %v2030
  %v2103 = vmul.f32 %v1455, %v2031
  %v2104 = vmul.f32 %v1456, %v2032
  %v2105 = vmul.f32 %v1457, %v2033
  %v2106 = vmul.f32 %v1458, %v2034
  %v2107 = vmul.f32 %v1459, %v2035
  %v2108 = vmul.f32 %v1460, %v2036
  %v2109 = vmul.f32 %v1461, %v2037
  %v2110 = vmul.f32 %v1462, %v2038
  %v2111 = vmul.f32 %v1463, %v2039
  %v2112 = vmul.f32 %v1464, %v2040
  %v2113 = vmul.f32 %v1465, %v2041
  %v2114 = vmul.f32 %v1466, %v2042
  %v2115 = vmul.f32 %v1467, %v2043
  %v2116 = vmul.f32 %v1468, %v2044
  %v2117 = vmul.f32 %v1469, %v2045
  %v2118 = vmul.f32 %v1470, %v2046
  %v2119 = vmul.f32 %v1471, %v2047
  %v2120 = vmul.f32 %v1472, %v2048
  %v2121 = vmul.f32 %v1473, %v2049
  %v2122 = vmul.f32 %v1474, %v2050
  %v2123 = vmul.f32 %v1475, %v2051
  %v2124 = vmul.f32 %v1476, %v2052
  %v2125 = vmul.f32 %v1477, %v2053
  %v2126 = vmul.f32 %v1478, %v2054
  %v2127 = vmul.f32 %v1479, %v2055
  %v2128 = vmul.f32 %v1480, %v2056
  %v2129 = vmul.f32 %v1481, %v2057
  %v2130 = vmul.f32 %v1482, %v2058
  %v2131 = vmul.f32 %v1483, %v2059
  %v2132 = vsub.f32 %v2060, %v2096
  %v2133 = vsub.f32 %v2061, %v2097
  %v2134 = vsub.f32 %v2062, %v2098
  %v2135 = vsub.f32 %v2063, %v2099
  %v2136 = vsub.f32 %v2064, %v2100
  %v2137 = vsub.f32 %v2065, %v2101
  %v2138 = vsub.f32 %v2066, %v2102
  %v2139 = vsub.f32 %v2067, %v2103
  %v2140 = vsub.f32 %v2068, %v2104
  %v2141 = vsub.f32 %v2069, %v2105
  %v2142 = vsub.f32 %v2070, %v2106
  %v2143 = vsub.f32 %v2071, %v2107
  %v2144 = vsub.f32 %v2072, %v2108
  %v2145 = vsub.f32 %v2073, %v2109
  %v2146 = vsub.f32 %v2074, %v2110
  %v2147 = vsub.f32 %v2075, %v2111
  %v2148 = vsub.f32 %v2076, %v2112
  %v2149 = vsub.f32 %v2077, %v2113
  %v2150 = vsub.f32 %v2078, %v2114
  %v2151 = vsub.f32 %v2079, %v2115
  %v2152 = vsub.f32 %v2080, %v2116
  %v2153 = vsub.f32 %v2081, %v2117
  %v2154 = vsub.f32 %v2082, %v2118
  %v2155 = vsub.f32 %v2083, %v2119
  %v2156 = vsub.f32 %v2084, %v2120
  %v2157 = vsub.f32 %v2085, %v2121
  %v2158 = vsub.f32 %v2086, %v2122
  %v2159 = vsub.f32 %v2087, %v2123
  %v2160 = vsub.f32 %v2088, %v2124
  %v2161 = vsub.f32 %v2089, %v2125
  %v2162 = vsub.f32 %v2090, %v2126
  %v2163 = vsub.f32 %v2091, %v2127
  %v2164 = vsub.f32 %v2092, %v2128
  %v2165 = vsub.f32 %v2093, %v2129
  %v2166 = vsub.f32 %v2094, %v2130
  %v2167 = vsub.f32 %v2095, %v2131
  %2169 = vset.pattern.permute.xlu0 0
  %2170 = vperm.xlu0 %2169, %v2024
  %v2171 = vpop.permute.xlu0 %2170
  %2174 = vset.pattern.permute.xlu0 0
  %2175 = vperm.xlu0 %2174, %v2025
  %v2176 = vpop.permute.xlu0 %2175
  %2179 = vset.pattern.permute.xlu0 0
  %2180 = vperm.xlu0 %2179, %v2026
  %v2181 = vpop.permute.xlu0 %2180
  %2184 = vset.pattern.permute.xlu0 0
  %2185 = vperm.xlu0 %2184, %v2027
  %v2186 = vpop.permute.xlu0 %2185
  %2189 = vset.pattern.permute.xlu0 0
  %2190 = vperm.xlu0 %2189, %v2028
  %v2191 = vpop.permute.xlu0 %2190
  %2194 = vset.pattern.permute.xlu0 0
  %2195 = vperm.xlu0 %2194, %v2029
  %v2196 = vpop.permute.xlu0 %2195
  %2199 = vset.pattern.permute.xlu0 0
  %2200 = vperm.xlu0 %2199, %v2030
  %v2201 = vpop.permute.xlu0 %2200
  %2204 = vset.pattern.permute.xlu0 0
  %2205 = vperm.xlu0 %2204, %v2031
  %v2206 = vpop.permute.xlu0 %2205
  %2209 = vset.pattern.permute.xlu0 0
  %2210 = vperm.xlu0 %2209, %v2032
  %v2211 = vpop.permute.xlu0 %2210
  %2214 = vset.pattern.permute.xlu0 0
  %2215 = vperm.xlu0 %2214, %v2033
  %v2216 = vpop.permute.xlu0 %2215
  %2219 = vset.pattern.permute.xlu0 0
  %2220 = vperm.xlu0 %2219, %v2034
  %v2221 = vpop.permute.xlu0 %2220
  %2224 = vset.pattern.permute.xlu0 0
  %2225 = vperm.xlu0 %2224, %v2035
  %v2226 = vpop.permute.xlu0 %2225
  %2229 = vset.pattern.permute.xlu0 0
  %2230 = vperm.xlu0 %2229, %v2036
  %v2231 = vpop.permute.xlu0 %2230
  %2234 = vset.pattern.permute.xlu0 0
  %2235 = vperm.xlu0 %2234, %v2037
  %v2236 = vpop.permute.xlu0 %2235
  %2239 = vset.pattern.permute.xlu0 0
  %2240 = vperm.xlu0 %2239, %v2038
  %v2241 = vpop.permute.xlu0 %2240
  %2244 = vset.pattern.permute.xlu0 0
  %2245 = vperm.xlu0 %2244, %v2039
  %v2246 = vpop.permute.xlu0 %2245
  %2249 = vset.pattern.permute.xlu0 0
  %2250 = vperm.xlu0 %2249, %v2040
  %v2251 = vpop.permute.xlu0 %2250
  %2254 = vset.pattern.permute.xlu0 0
  %2255 = vperm.xlu0 %2254, %v2041
  %v2256 = vpop.permute.xlu0 %2255
  %2259 = vset.pattern.permute.xlu0 0
  %2260 = vperm.xlu0 %2259, %v2042
  %v2261 = vpop.permute.xlu0 %2260
  %2264 = vset.pattern.permute.xlu0 0
  %2265 = vperm.xlu0 %2264, %v2043
  %v2266 = vpop.permute.xlu0 %2265
  %2269 = vset.pattern.permute.xlu0 0
  %2270 = vperm.xlu0 %2269, %v2044
  %v2271 = vpop.permute.xlu0 %2270
  %2274 = vset.pattern.permute.xlu0 0
  %2275 = vperm.xlu0 %2274, %v2045
  %v2276 = vpop.permute.xlu0 %2275
  %2279 = vset.pattern.permute.xlu0 0
  %2280 = vperm.xlu0 %2279, %v2046
  %v2281 = vpop.permute.xlu0 %2280
  %2284 = vset.pattern.permute.xlu0 0
  %2285 = vperm.xlu0 %2284, %v2047
  %v2286 = vpop.permute.xlu0 %2285
  %2289 = vset.pattern.permute.xlu0 0
  %2290 = vperm.xlu0 %2289, %v2048
  %v2291 = vpop.permute.xlu0 %2290
  %2294 = vset.pattern.permute.xlu0 0
  %2295 = vperm.xlu0 %2294, %v2049
  %v2296 = vpop.permute.xlu0 %2295
  %2299 = vset.pattern.permute.xlu0 0
  %2300 = vperm.xlu0 %2299, %v2050
  %v2301 = vpop.permute.xlu0 %2300
  %2304 = vset.pattern.permute.xlu0 0
  %2305 = vperm.xlu0 %2304, %v2051
  %v2306 = vpop.permute.xlu0 %2305
  %2309 = vset.pattern.permute.xlu0 0
  %2310 = vperm.xlu0 %2309, %v2052
  %v2311 = vpop.permute.xlu0 %2310
  %2314 = vset.pattern.permute.xlu0 0
  %2315 = vperm.xlu0 %2314, %v2053
  %v2316 = vpop.permute.xlu0 %2315
  %2319 = vset.pattern.permute.xlu0 0
  %2320 = vperm.xlu0 %2319, %v2054
  %v2321 = vpop.permute.xlu0 %2320
  %2324 = vset.pattern.permute.xlu0 0
  %2325 = vperm.xlu0 %2324, %v2055
  %v2326 = vpop.permute.xlu0 %2325
  %2329 = vset.pattern.permute.xlu0 0
  %2330 = vperm.xlu0 %2329, %v2056
  %v2331 = vpop.permute.xlu0 %2330
  %2334 = vset.pattern.permute.xlu0 0
  %2335 = vperm.xlu0 %2334, %v2057
  %v2336 = vpop.permute.xlu0 %2335
  %2339 = vset.pattern.permute.xlu0 0
  %2340 = vperm.xlu0 %2339, %v2058
  %v2341 = vpop.permute.xlu0 %2340
  %2344 = vset.pattern.permute.xlu0 0
  %2345 = vperm.xlu0 %2344, %v2059
  %v2346 = vpop.permute.xlu0 %2345
  %v2348 = vmul.f32 %v456, %v2171
  %v2349 = vmul.f32 %v458, %v2176
  %v2350 = vmul.f32 %v461, %v2181
  %v2351 = vmul.f32 %v463, %v2186
  %v2352 = vmul.f32 %v466, %v2191
  %v2353 = vmul.f32 %v468, %v2196
  %v2354 = vmul.f32 %v471, %v2201
  %v2355 = vmul.f32 %v473, %v2206
  %v2356 = vmul.f32 %v476, %v2211
  %v2357 = vmul.f32 %v478, %v2216
  %v2358 = vmul.f32 %v481, %v2221
  %v2359 = vmul.f32 %v483, %v2226
  %v2360 = vmul.f32 %v486, %v2231
  %v2361 = vmul.f32 %v488, %v2236
  %v2362 = vmul.f32 %v491, %v2241
  %v2363 = vmul.f32 %v493, %v2246
  %v2364 = vmul.f32 %v496, %v2251
  %v2365 = vmul.f32 %v498, %v2256
  %v2366 = vmul.f32 %v501, %v2261
  %v2367 = vmul.f32 %v503, %v2266
  %v2368 = vmul.f32 %v506, %v2271
  %v2369 = vmul.f32 %v508, %v2276
  %v2370 = vmul.f32 %v511, %v2281
  %v2371 = vmul.f32 %v513, %v2286
  %v2372 = vmul.f32 %v516, %v2291
  %v2373 = vmul.f32 %v518, %v2296
  %v2374 = vmul.f32 %v521, %v2301
  %v2375 = vmul.f32 %v523, %v2306
  %v2376 = vmul.f32 %v526, %v2311
  %v2377 = vmul.f32 %v528, %v2316
  %v2378 = vmul.f32 %v531, %v2321
  %v2379 = vmul.f32 %v533, %v2326
  %v2380 = vmul.f32 %v536, %v2331
  %v2381 = vmul.f32 %v538, %v2336
  %v2382 = vmul.f32 %v541, %v2341
  %v2383 = vmul.f32 %v543, %v2346
  %2385 = vset.pattern.permute.xlu0 0
  %2386 = vperm.xlu0 %2385, %v2132
  %v2387 = vpop.permute.xlu0 %2386
  %2390 = vset.pattern.permute.xlu0 0
  %2391 = vperm.xlu0 %2390, %v2133
  %v2392 = vpop.permute.xlu0 %2391
  %2395 = vset.pattern.permute.xlu0 0
  %2396 = vperm.xlu0 %2395, %v2134
  %v2397 = vpop.permute.xlu0 %2396
  %2400 = vset.pattern.permute.xlu0 0
  %2401 = vperm.xlu0 %2400, %v2135
  %v2402 = vpop.permute.xlu0 %2401
  %2405 = vset.pattern.permute.xlu0 0
  %2406 = vperm.xlu0 %2405, %v2136
  %v2407 = vpop.permute.xlu0 %2406
  %2410 = vset.pattern.permute.xlu0 0
  %2411 = vperm.xlu0 %2410, %v2137
  %v2412 = vpop.permute.xlu0 %2411
  %2415 = vset.pattern.permute.xlu0 0
  %2416 = vperm.xlu0 %2415, %v2138
  %v2417 = vpop.permute.xlu0 %2416
  %2420 = vset.pattern.permute.xlu0 0
  %2421 = vperm.xlu0 %2420, %v2139
  %v2422 = vpop.permute.xlu0 %2421
  %2425 = vset.pattern.permute.xlu0 0
  %2426 = vperm.xlu0 %2425, %v2140
  %v2427 = vpop.permute.xlu0 %2426
  %2430 = vset.pattern.permute.xlu0 0
  %2431 = vperm.xlu0 %2430, %v2141
  %v2432 = vpop.permute.xlu0 %2431
  %2435 = vset.pattern.permute.xlu0 0
  %2436 = vperm.xlu0 %2435, %v2142
  %v2437 = vpop.permute.xlu0 %2436
  %2440 = vset.pattern.permute.xlu0 0
  %2441 = vperm.xlu0 %2440, %v2143
  %v2442 = vpop.permute.xlu0 %2441
  %2445 = vset.pattern.permute.xlu0 0
  %2446 = vperm.xlu0 %2445, %v2144
  %v2447 = vpop.permute.xlu0 %2446
  %2450 = vset.pattern.permute.xlu0 0
  %2451 = vperm.xlu0 %2450, %v2145
  %v2452 = vpop.permute.xlu0 %2451
  %2455 = vset.pattern.permute.xlu0 0
  %2456 = vperm.xlu0 %2455, %v2146
  %v2457 = vpop.permute.xlu0 %2456
  %2460 = vset.pattern.permute.xlu0 0
  %2461 = vperm.xlu0 %2460, %v2147
  %v2462 = vpop.permute.xlu0 %2461
  %2465 = vset.pattern.permute.xlu0 0
  %2466 = vperm.xlu0 %2465, %v2148
  %v2467 = vpop.permute.xlu0 %2466
  %2470 = vset.pattern.permute.xlu0 0
  %2471 = vperm.xlu0 %2470, %v2149
  %v2472 = vpop.permute.xlu0 %2471
  %2475 = vset.pattern.permute.xlu0 0
  %2476 = vperm.xlu0 %2475, %v2150
  %v2477 = vpop.permute.xlu0 %2476
  %2480 = vset.pattern.permute.xlu0 0
  %2481 = vperm.xlu0 %2480, %v2151
  %v2482 = vpop.permute.xlu0 %2481
  %2485 = vset.pattern.permute.xlu0 0
  %2486 = vperm.xlu0 %2485, %v2152
  %v2487 = vpop.permute.xlu0 %2486
  %2490 = vset.pattern.permute.xlu0 0
  %2491 = vperm.xlu0 %2490, %v2153
  %v2492 = vpop.permute.xlu0 %2491
  %2495 = vset.pattern.permute.xlu0 0
  %2496 = vperm.xlu0 %2495, %v2154
  %v2497 = vpop.permute.xlu0 %2496
  %2500 = vset.pattern.permute.xlu0 0
  %2501 = vperm.xlu0 %2500, %v2155
  %v2502 = vpop.permute.xlu0 %2501
  %2505 = vset.pattern.permute.xlu0 0
  %2506 = vperm.xlu0 %2505, %v2156
  %v2507 = vpop.permute.xlu0 %2506
  %2510 = vset.pattern.permute.xlu0 0
  %2511 = vperm.xlu0 %2510, %v2157
  %v2512 = vpop.permute.xlu0 %2511
  %2515 = vset.pattern.permute.xlu0 0
  %2516 = vperm.xlu0 %2515, %v2158
  %v2517 = vpop.permute.xlu0 %2516
  %2520 = vset.pattern.permute.xlu0 0
  %2521 = vperm.xlu0 %2520, %v2159
  %v2522 = vpop.permute.xlu0 %2521
  %2525 = vset.pattern.permute.xlu0 0
  %2526 = vperm.xlu0 %2525, %v2160
  %v2527 = vpop.permute.xlu0 %2526
  %2530 = vset.pattern.permute.xlu0 0
  %2531 = vperm.xlu0 %2530, %v2161
  %v2532 = vpop.permute.xlu0 %2531
  %2535 = vset.pattern.permute.xlu0 0
  %2536 = vperm.xlu0 %2535, %v2162
  %v2537 = vpop.permute.xlu0 %2536
  %2540 = vset.pattern.permute.xlu0 0
  %2541 = vperm.xlu0 %2540, %v2163
  %v2542 = vpop.permute.xlu0 %2541
  %2545 = vset.pattern.permute.xlu0 0
  %2546 = vperm.xlu0 %2545, %v2164
  %v2547 = vpop.permute.xlu0 %2546
  %2550 = vset.pattern.permute.xlu0 0
  %2551 = vperm.xlu0 %2550, %v2165
  %v2552 = vpop.permute.xlu0 %2551
  %2555 = vset.pattern.permute.xlu0 0
  %2556 = vperm.xlu0 %2555, %v2166
  %v2557 = vpop.permute.xlu0 %2556
  %2560 = vset.pattern.permute.xlu0 0
  %2561 = vperm.xlu0 %2560, %v2167
  %v2562 = vpop.permute.xlu0 %2561
  %v2564 = vadd.f32 %v2348, %v2387
  %v2565 = vadd.f32 %v2349, %v2392
  %v2566 = vadd.f32 %v2350, %v2397
  %v2567 = vadd.f32 %v2351, %v2402
  %v2568 = vadd.f32 %v2352, %v2407
  %v2569 = vadd.f32 %v2353, %v2412
  %v2570 = vadd.f32 %v2354, %v2417
  %v2571 = vadd.f32 %v2355, %v2422
  %v2572 = vadd.f32 %v2356, %v2427
  %v2573 = vadd.f32 %v2357, %v2432
  %v2574 = vadd.f32 %v2358, %v2437
  %v2575 = vadd.f32 %v2359, %v2442
  %v2576 = vadd.f32 %v2360, %v2447
  %v2577 = vadd.f32 %v2361, %v2452
  %v2578 = vadd.f32 %v2362, %v2457
  %v2579 = vadd.f32 %v2363, %v2462
  %v2580 = vadd.f32 %v2364, %v2467
  %v2581 = vadd.f32 %v2365, %v2472
  %v2582 = vadd.f32 %v2366, %v2477
  %v2583 = vadd.f32 %v2367, %v2482
  %v2584 = vadd.f32 %v2368, %v2487
  %v2585 = vadd.f32 %v2369, %v2492
  %v2586 = vadd.f32 %v2370, %v2497
  %v2587 = vadd.f32 %v2371, %v2502
  %v2588 = vadd.f32 %v2372, %v2507
  %v2589 = vadd.f32 %v2373, %v2512
  %v2590 = vadd.f32 %v2374, %v2517
  %v2591 = vadd.f32 %v2375, %v2522
  %v2592 = vadd.f32 %v2376, %v2527
  %v2593 = vadd.f32 %v2377, %v2532
  %v2594 = vadd.f32 %v2378, %v2537
  %v2595 = vadd.f32 %v2379, %v2542
  %v2596 = vadd.f32 %v2380, %v2547
  %v2597 = vadd.f32 %v2381, %v2552
  %v2598 = vadd.f32 %v2382, %v2557
  %v2599 = vadd.f32 %v2383, %v2562
  %2600 = vst.msk [vmem:[%s5] sm:$0xff] %vm545, %v2564
  %2601 = vst.msk [vmem:[%s5 + $0x8] sm:$0xff] %vm545, %v2565
  %2602 = vst.msk [vmem:[%s5 + $0x10] sm:$0xff] %vm545, %v2566
  %2603 = vst.msk [vmem:[%s5 + $0x18] sm:$0xff] %vm545, %v2567
  %2604 = vst.msk [vmem:[%s5 + $0x20] sm:$0xff] %vm545, %v2568
  %2605 = vst.msk [vmem:[%s5 + $0x28] sm:$0xff] %vm545, %v2569
  %2606 = vst.msk [vmem:[%s5 + $0x30] sm:$0xff] %vm545, %v2570
  %2607 = vst.msk [vmem:[%s5 + $0x38] sm:$0xff] %vm545, %v2571
  %2608 = vst.msk [vmem:[%s5 + $0x40] sm:$0xff] %vm545, %v2572
  %2609 = vst.msk [vmem:[%s5 + $0x48] sm:$0xff] %vm545, %v2573
  %2610 = vst.msk [vmem:[%s5 + $0x50] sm:$0xff] %vm545, %v2574
  %2611 = vst.msk [vmem:[%s5 + $0x58] sm:$0xff] %vm545, %v2575
  %2612 = vst.msk [vmem:[%s5 + $0x60] sm:$0xff] %vm545, %v2576
  %2613 = vst.msk [vmem:[%s5 + $0x68] sm:$0xff] %vm545, %v2577
  %2614 = vst.msk [vmem:[%s5 + $0x70] sm:$0xff] %vm545, %v2578
  %2615 = vst.msk [vmem:[%s5 + $0x78] sm:$0xff] %vm545, %v2579
  %2616 = vst.msk [vmem:[%s5 + $0x80] sm:$0xff] %vm545, %v2580
  %2617 = vst.msk [vmem:[%s5 + $0x88] sm:$0xff] %vm545, %v2581
  %2618 = vst.msk [vmem:[%s5 + $0x90] sm:$0xff] %vm545, %v2582
  %2619 = vst.msk [vmem:[%s5 + $0x98] sm:$0xff] %vm545, %v2583
  %2620 = vst.msk [vmem:[%s5 + $0xa0] sm:$0xff] %vm545, %v2584
  %2621 = vst.msk [vmem:[%s5 + $0xa8] sm:$0xff] %vm545, %v2585
  %2622 = vst.msk [vmem:[%s5 + $0xb0] sm:$0xff] %vm545, %v2586
  %2623 = vst.msk [vmem:[%s5 + $0xb8] sm:$0xff] %vm545, %v2587
  %2624 = vst.msk [vmem:[%s5 + $0xc0] sm:$0xff] %vm545, %v2588
  %2625 = vst.msk [vmem:[%s5 + $0xc8] sm:$0xff] %vm545, %v2589
  %2626 = vst.msk [vmem:[%s5 + $0xd0] sm:$0xff] %vm545, %v2590
  %2627 = vst.msk [vmem:[%s5 + $0xd8] sm:$0xff] %vm545, %v2591
  %2628 = vst.msk [vmem:[%s5 + $0xe0] sm:$0xff] %vm545, %v2592
  %2629 = vst.msk [vmem:[%s5 + $0xe8] sm:$0xff] %vm545, %v2593
  %2630 = vst.msk [vmem:[%s5 + $0xf0] sm:$0xff] %vm545, %v2594
  %2631 = vst.msk [vmem:[%s5 + $0xf8] sm:$0xff] %vm545, %v2595
  %2632 = vst.msk [vmem:[%s5 + $0x100] sm:$0xff] %vm545, %v2596
  %2633 = vst.msk [vmem:[%s5 + $0x108] sm:$0xff] %vm545, %v2597
  %2634 = vst.msk [vmem:[%s5 + $0x110] sm:$0xff] %vm545, %v2598
  %2635 = vst.msk [vmem:[%s5 + $0x118] sm:$0xff] %vm545, %v2599
  %v2636 = vmul.f32 %v1035, %v2171
  %v2637 = vmul.f32 %v1037, %v2176
  %v2638 = vmul.f32 %v1040, %v2181
  %v2639 = vmul.f32 %v1042, %v2186
  %v2640 = vmul.f32 %v1045, %v2191
  %v2641 = vmul.f32 %v1047, %v2196
  %v2642 = vmul.f32 %v1050, %v2201
  %v2643 = vmul.f32 %v1052, %v2206
  %v2644 = vmul.f32 %v1055, %v2211
  %v2645 = vmul.f32 %v1057, %v2216
  %v2646 = vmul.f32 %v1060, %v2221
  %v2647 = vmul.f32 %v1062, %v2226
  %v2648 = vmul.f32 %v1065, %v2231
  %v2649 = vmul.f32 %v1067, %v2236
  %v2650 = vmul.f32 %v1070, %v2241
  %v2651 = vmul.f32 %v1072, %v2246
  %v2652 = vmul.f32 %v1075, %v2251
  %v2653 = vmul.f32 %v1077, %v2256
  %v2654 = vmul.f32 %v1080, %v2261
  %v2655 = vmul.f32 %v1082, %v2266
  %v2656 = vmul.f32 %v1085, %v2271
  %v2657 = vmul.f32 %v1087, %v2276
  %v2658 = vmul.f32 %v1090, %v2281
  %v2659 = vmul.f32 %v1092, %v2286
  %v2660 = vmul.f32 %v1095, %v2291
  %v2661 = vmul.f32 %v1097, %v2296
  %v2662 = vmul.f32 %v1100, %v2301
  %v2663 = vmul.f32 %v1102, %v2306
  %v2664 = vmul.f32 %v1105, %v2311
  %v2665 = vmul.f32 %v1107, %v2316
  %v2666 = vmul.f32 %v1110, %v2321
  %v2667 = vmul.f32 %v1112, %v2326
  %v2668 = vmul.f32 %v1115, %v2331
  %v2669 = vmul.f32 %v1117, %v2336
  %v2670 = vmul.f32 %v1120, %v2341
  %v2671 = vmul.f32 %v1122, %v2346
  %v2672 = vadd.f32 %v2636, %v2387
  %v2673 = vadd.f32 %v2637, %v2392
  %v2674 = vadd.f32 %v2638, %v2397
  %v2675 = vadd.f32 %v2639, %v2402
  %v2676 = vadd.f32 %v2640, %v2407
  %v2677 = vadd.f32 %v2641, %v2412
  %v2678 = vadd.f32 %v2642, %v2417
  %v2679 = vadd.f32 %v2643, %v2422
  %v2680 = vadd.f32 %v2644, %v2427
  %v2681 = vadd.f32 %v2645, %v2432
  %v2682 = vadd.f32 %v2646, %v2437
  %v2683 = vadd.f32 %v2647, %v2442
  %v2684 = vadd.f32 %v2648, %v2447
  %v2685 = vadd.f32 %v2649, %v2452
  %v2686 = vadd.f32 %v2650, %v2457
  %v2687 = vadd.f32 %v2651, %v2462
  %v2688 = vadd.f32 %v2652, %v2467
  %v2689 = vadd.f32 %v2653, %v2472
  %v2690 = vadd.f32 %v2654, %v2477
  %v2691 = vadd.f32 %v2655, %v2482
  %v2692 = vadd.f32 %v2656, %v2487
  %v2693 = vadd.f32 %v2657, %v2492
  %v2694 = vadd.f32 %v2658, %v2497
  %v2695 = vadd.f32 %v2659, %v2502
  %v2696 = vadd.f32 %v2660, %v2507
  %v2697 = vadd.f32 %v2661, %v2512
  %v2698 = vadd.f32 %v2662, %v2517
  %v2699 = vadd.f32 %v2663, %v2522
  %v2700 = vadd.f32 %v2664, %v2527
  %v2701 = vadd.f32 %v2665, %v2532
  %v2702 = vadd.f32 %v2666, %v2537
  %v2703 = vadd.f32 %v2667, %v2542
  %v2704 = vadd.f32 %v2668, %v2547
  %v2705 = vadd.f32 %v2669, %v2552
  %v2706 = vadd.f32 %v2670, %v2557
  %v2707 = vadd.f32 %v2671, %v2562
  %s2708 = scalar_lea.vmem %s5, 288
  %2709 = vst.msk [vmem:[%s2708] sm:$0xff] %vm545, %v2672
  %2710 = vst.msk [vmem:[%s2708 + $0x8] sm:$0xff] %vm545, %v2673
  %2711 = vst.msk [vmem:[%s2708 + $0x10] sm:$0xff] %vm545, %v2674
  %2712 = vst.msk [vmem:[%s2708 + $0x18] sm:$0xff] %vm545, %v2675
  %2713 = vst.msk [vmem:[%s2708 + $0x20] sm:$0xff] %vm545, %v2676
  %2714 = vst.msk [vmem:[%s2708 + $0x28] sm:$0xff] %vm545, %v2677
  %2715 = vst.msk [vmem:[%s2708 + $0x30] sm:$0xff] %vm545, %v2678
  %2716 = vst.msk [vmem:[%s2708 + $0x38] sm:$0xff] %vm545, %v2679
  %2717 = vst.msk [vmem:[%s2708 + $0x40] sm:$0xff] %vm545, %v2680
  %2718 = vst.msk [vmem:[%s2708 + $0x48] sm:$0xff] %vm545, %v2681
  %2719 = vst.msk [vmem:[%s2708 + $0x50] sm:$0xff] %vm545, %v2682
  %2720 = vst.msk [vmem:[%s2708 + $0x58] sm:$0xff] %vm545, %v2683
  %2721 = vst.msk [vmem:[%s2708 + $0x60] sm:$0xff] %vm545, %v2684
  %2722 = vst.msk [vmem:[%s2708 + $0x68] sm:$0xff] %vm545, %v2685
  %2723 = vst.msk [vmem:[%s2708 + $0x70] sm:$0xff] %vm545, %v2686
  %2724 = vst.msk [vmem:[%s2708 + $0x78] sm:$0xff] %vm545, %v2687
  %2725 = vst.msk [vmem:[%s2708 + $0x80] sm:$0xff] %vm545, %v2688
  %2726 = vst.msk [vmem:[%s2708 + $0x88] sm:$0xff] %vm545, %v2689
  %2727 = vst.msk [vmem:[%s2708 + $0x90] sm:$0xff] %vm545, %v2690
  %2728 = vst.msk [vmem:[%s2708 + $0x98] sm:$0xff] %vm545, %v2691
  %2729 = vst.msk [vmem:[%s2708 + $0xa0] sm:$0xff] %vm545, %v2692
  %2730 = vst.msk [vmem:[%s2708 + $0xa8] sm:$0xff] %vm545, %v2693
  %2731 = vst.msk [vmem:[%s2708 + $0xb0] sm:$0xff] %vm545, %v2694
  %2732 = vst.msk [vmem:[%s2708 + $0xb8] sm:$0xff] %vm545, %v2695
  %2733 = vst.msk [vmem:[%s2708 + $0xc0] sm:$0xff] %vm545, %v2696
  %2734 = vst.msk [vmem:[%s2708 + $0xc8] sm:$0xff] %vm545, %v2697
  %2735 = vst.msk [vmem:[%s2708 + $0xd0] sm:$0xff] %vm545, %v2698
  %2736 = vst.msk [vmem:[%s2708 + $0xd8] sm:$0xff] %vm545, %v2699
  %2737 = vst.msk [vmem:[%s2708 + $0xe0] sm:$0xff] %vm545, %v2700
  %2738 = vst.msk [vmem:[%s2708 + $0xe8] sm:$0xff] %vm545, %v2701
  %2739 = vst.msk [vmem:[%s2708 + $0xf0] sm:$0xff] %vm545, %v2702
  %2740 = vst.msk [vmem:[%s2708 + $0xf8] sm:$0xff] %vm545, %v2703
  %2741 = vst.msk [vmem:[%s2708 + $0x100] sm:$0xff] %vm545, %v2704
  %2742 = vst.msk [vmem:[%s2708 + $0x108] sm:$0xff] %vm545, %v2705
  %2743 = vst.msk [vmem:[%s2708 + $0x110] sm:$0xff] %vm545, %v2706
  %2744 = vst.msk [vmem:[%s2708 + $0x118] sm:$0xff] %vm545, %v2707
  // Predicated region
  $region22: #{conv_bn_forward.1} parent=0 // pred_check
    _
  $region23: #{conv_bn_forward.1} parent=0 // pred_check_branch
    %2746 = sbr.rel (0) target = $region25
  $region24: #{conv_bn_forward.1} parent=0 // pred_region
    _
  $region25: #{conv_bn_forward.1} parent=0 // pred_fallthru
    _
  // Predicated region
  $region26: #{conv_bn_forward.1} parent=0 // pred_check
    _
  $region27: #{conv_bn_forward.1} parent=0 // pred_check_branch
    %2748 = sbr.rel (0) target = $region29
  $region28: #{conv_bn_forward.1} parent=0 // pred_region
    _
  $region29: #{conv_bn_forward.1} parent=0 // pred_fallthru
    _

</llo_original>
